<compile_context>
chip_gen: v5e
topology: v5e:2x2
jax: 0.10.0
libtpu: 0.0.40
codegen_flags: <defaults>
</compile_context>

<pallas_src>
import jax
import jax.numpy as jnp
from jax.experimental import pallas as pl
from jax.experimental.pallas import tpu as pltpu

LANE = 128          # lane width; all kernel outputs are padded to this
BN_EPS = 1e-5


# ----------------------------- Pallas kernels ------------------------------ #

def _conv_bn_relu_pool_kernel(a0_ref, a1_ref, a2_ref, a3_ref,
                              w_ref, b_ref, o_ref):
    """Fused conv (as GEMM over im2col patches) + folded BN + ReLU + 2x2 maxpool.

    a{k}_ref: (tm, K) im2col patches for pooling-window position k in
              {(0,0),(0,1),(1,0),(1,1)}; same GEMM row = same pooled output pixel.
    w_ref:    (K, 128) BN-folded conv weights, zero-padded to 128 out channels.
    b_ref:    (1, 128) BN-folded bias, zero-padded.
    o_ref:    (tm, 128) lane-dense output block.
    pool(relu(conv + b)) == relu(max_k(conv_k) + b) since bias is shared and
    ReLU is monotone, so the max is a cheap full-lane VPU op in the epilogue.
    """
    w = w_ref[...]
    y0 = jnp.dot(a0_ref[...], w, preferred_element_type=jnp.float32)
    y1 = jnp.dot(a1_ref[...], w, preferred_element_type=jnp.float32)
    y2 = jnp.dot(a2_ref[...], w, preferred_element_type=jnp.float32)
    y3 = jnp.dot(a3_ref[...], w, preferred_element_type=jnp.float32)
    y = jnp.maximum(jnp.maximum(y0, y1), jnp.maximum(y2, y3))
    y = jnp.maximum(y + b_ref[...], 0.0)
    o_ref[...] = y.astype(o_ref.dtype)


def _fc_head_kernel(x_ref, w1_ref, b1_ref, w2_ref, b2_ref, o_ref):
    """Fused fc1 + ReLU + (dropout=identity, eval) + fc2.

    x_ref: (tm, 400); w1_ref: (400, 128) (100 real cols); w2_ref: (128, 128)
    (100 real rows, 15 real cols); biases zero-padded. Hidden activation never
    leaves VMEM/vregs; output block is lane-dense (tm, 128).
    """
    h = jnp.dot(x_ref[...], w1_ref[...], preferred_element_type=jnp.float32)
    h = jnp.maximum(h + b1_ref[...], 0.0)
    y = jnp.dot(h, w2_ref[...], preferred_element_type=jnp.float32) + b2_ref[...]
    o_ref[...] = y.astype(o_ref.dtype)


# ------------------------------ tiling helpers ------------------------------ #

def _round_up(x, m):
    return ((x + m - 1) // m) * m


def _row_tiling(m, *, max_tm=1024, small=64):
    """Pick (tile_rows, padded_rows).

    Tiny M -> one whole-M block (per-grid-step overhead dominates otherwise).
    Larger M -> at least 2 "parallel" row blocks so both v7x TensorCores get
    work, with tiles as large as possible (<= max_tm).
    """
    if m <= small:
        tm = _round_up(max(m, 1), 8)
        return tm, tm
    nblk = max(2, pl.cdiv(m, max_tm))
    tm = _round_up(pl.cdiv(m, nblk), 8)
    return tm, tm * nblk


def _pad_rows_to(a, rows):
    pad = rows - a.shape[0]
    if pad:
        a = jnp.pad(a, ((0, pad),) + ((0, 0),) * (a.ndim - 1))
    return a


# ----------------------- layout plumbing (plain JAX) ------------------------ #

def _im2col_pool_windows(x, kh, kw):
    """x: (N,H,W,C) NHWC -> four (N*Hp*Wp, kh*kw*C) matrices, one per 2x2 pool
    sub-lattice, plus pooled spatial dims. Row order (n, hp, wp); K order
    (kh, kw, Cin) matching the (2,3,1,0) weight transpose in _fold_conv_bn."""
    N, H, W, C = x.shape
    Ho, Wo = H - kh + 1, W - kw + 1
    Hp, Wp = Ho // 2, Wo // 2
    patches = [x[:, i:i + Ho, j:j + Wo, :] for i in range(kh) for j in range(kw)]
    p = jnp.stack(patches, axis=3)                     # (N, Ho, Wo, kh*kw, C)
    mats = []
    for dy in (0, 1):
        for dx in (0, 1):
            q = p[:, dy:dy + 2 * Hp:2, dx:dx + 2 * Wp:2]   # (N, Hp, Wp, kh*kw, C)
            mats.append(q.reshape(N * Hp * Wp, kh * kw * C))
    return mats, (N, Hp, Wp)


def _fold_conv_bn(w, b, gamma, beta, mean, var, eps=BN_EPS):
    """Fold eval-mode BatchNorm into conv weights; return GEMM-form weights
    zero-padded to LANE output columns (lane-dense, unmasked stores)."""
    scale = gamma / jnp.sqrt(var + eps)                # (Cout,)
    w_eff = w * scale[:, None, None, None]             # (Cout, Cin, kh, kw)
    b_eff = (b - mean) * scale + beta
    Cout, Cin, kh, kw = w.shape
    w_mat = jnp.transpose(w_eff, (2, 3, 1, 0)).reshape(kh * kw * Cin, Cout)
    w_mat = jnp.pad(w_mat, ((0, 0), (0, LANE - Cout))).astype(jnp.float32)
    b_vec = jnp.pad(b_eff, (0, LANE - Cout)).reshape(1, LANE).astype(jnp.float32)
    return w_mat, b_vec


def _prep_fc_params(params):
    """fc weights in PyTorch (out,in) layout with NCHW flatten -> kernel layout:
    column-permute fc1 to NHWC flatten order, transpose to (in,out), zero-pad
    to LANE-wide outputs so both GEMMs are lane-dense."""
    fc1_w, fc1_b = params["fc1_w"], params["fc1_b"]    # (100, 400), (100,)
    fc2_w, fc2_b = params["fc2_w"], params["fc2_b"]    # (15, 100), (15,)
    # (100, C=16, H=5, W=5) -> (100, H, W, C) so NHWC-flattened activations match.
    w1 = fc1_w.reshape(100, 16, 5, 5).transpose(0, 2, 3, 1).reshape(100, 400)
    w1 = jnp.pad(w1.T, ((0, 0), (0, LANE - 100))).astype(jnp.float32)       # (400, 128)
    b1 = jnp.pad(fc1_b, (0, LANE - 100)).reshape(1, LANE).astype(jnp.float32)
    w2 = jnp.pad(fc2_w.T, ((0, LANE - 100), (0, LANE - 15))).astype(jnp.float32)  # (128, 128)
    b2 = jnp.pad(fc2_b, (0, LANE - 15)).reshape(1, LANE).astype(jnp.float32)
    return w1, b1, w2, b2


# ------------------------------ stage wrappers ------------------------------ #

def conv_bn_relu_pool(x, w_mat, bias, kh, kw, cout):
    """x: (N,H,W,C) NHWC -> (N, Hp, Wp, cout), one fused pallas_call."""
    mats, (N, Hp, Wp) = _im2col_pool_windows(x, kh, kw)
    M, K = mats[0].shape
    tm, Mp = _row_tiling(M)
    mats = [_pad_rows_to(m.astype(jnp.float32), Mp) for m in mats]
    Nw = w_mat.shape[1]                                # LANE (128)
    # NOTE: weight/bias blocks are grid-invariant; with a 1-2 step grid the
    # default double-buffering cost is negligible, so pl.Buffered(1) is skipped.
    in_specs = [pl.BlockSpec((tm, K), lambda i: (i, 0)) for _ in range(4)]
    in_specs += [pl.BlockSpec((K, Nw), lambda i: (0, 0)),
                 pl.BlockSpec((1, Nw), lambda i: (0, 0))]
    out = pl.pallas_call(
        _conv_bn_relu_pool_kernel,
        out_shape=jax.ShapeDtypeStruct((Mp, Nw), jnp.float32),
        grid=(Mp // tm,),
        in_specs=in_specs,
        out_specs=pl.BlockSpec((tm, Nw), lambda i: (i, 0)),
        compiler_params=pltpu.CompilerParams(
            dimension_semantics=("parallel",)),
    )(*mats, w_mat, bias)
    return out[:M, :cout].reshape(N, Hp, Wp, cout)


def fc_head(x, w1, b1, w2, b2, n_classes):
    """x: (N, 400) -> (N, n_classes), one fused pallas_call (fc1+ReLU+fc2)."""
    M, K = x.shape
    tm, Mp = _row_tiling(M)
    x_p = _pad_rows_to(x.astype(jnp.float32), Mp)
    H, O = w1.shape[1], w2.shape[1]
    out = pl.pallas_call(
        _fc_head_kernel,
        out_shape=jax.ShapeDtypeStruct((Mp, O), jnp.float32),
        grid=(Mp // tm,),
        in_specs=[pl.BlockSpec((tm, K), lambda i: (i, 0)),
                  pl.BlockSpec((K, H), lambda i: (0, 0)),
                  pl.BlockSpec((1, H), lambda i: (0, 0)),
                  pl.BlockSpec((H, O), lambda i: (0, 0)),
                  pl.BlockSpec((1, O), lambda i: (0, 0))],
        out_specs=pl.BlockSpec((tm, O), lambda i: (i, 0)),
        compiler_params=pltpu.CompilerParams(
            dimension_semantics=("parallel",)),
    )(x_p, w1, b1, w2, b2)
    return out[:M, :n_classes]


# ------------------------------ parameters --------------------------------- #

def init_params(key):
    ks = jax.random.split(key, 16)
    p = {}
    p["conv1_w"] = 0.1 * jax.random.normal(ks[0], (8, 1, 5, 5), jnp.float32)
    p["conv1_b"] = 0.1 * jax.random.normal(ks[1], (8,), jnp.float32)
    p["bn1_gamma"] = jax.random.uniform(ks[2], (8,), jnp.float32, 0.5, 1.5)
    p["bn1_beta"] = 0.1 * jax.random.normal(ks[3], (8,), jnp.float32)
    p["bn1_mean"] = 0.1 * jax.random.normal(ks[4], (8,), jnp.float32)
    p["bn1_var"] = jax.random.uniform(ks[5], (8,), jnp.float32, 0.5, 1.5)
    p["conv2_w"] = 0.1 * jax.random.normal(ks[6], (16, 8, 5, 5), jnp.float32)
    p["conv2_b"] = 0.1 * jax.random.normal(ks[7], (16,), jnp.float32)
    p["bn2_gamma"] = jax.random.uniform(ks[8], (16,), jnp.float32, 0.5, 1.5)
    p["bn2_beta"] = 0.1 * jax.random.normal(ks[9], (16,), jnp.float32)
    p["bn2_mean"] = 0.1 * jax.random.normal(ks[10], (16,), jnp.float32)
    p["bn2_var"] = jax.random.uniform(ks[11], (16,), jnp.float32, 0.5, 1.5)
    p["fc1_w"] = 0.05 * jax.random.normal(ks[12], (100, 400), jnp.float32)  # (out,in), NCHW flatten
    p["fc1_b"] = 0.05 * jax.random.normal(ks[13], (100,), jnp.float32)
    p["fc2_w"] = 0.05 * jax.random.normal(ks[14], (15, 100), jnp.float32)   # (out,in)
    p["fc2_b"] = 0.05 * jax.random.normal(ks[15], (15,), jnp.float32)
    return p


# ------------------------------- forward ----------------------------------- #

def simple_net_final_forward(params, x_nchw):
    """x_nchw: (N, 1, 32, 32) float32 -> raw class scores (N, 15)."""
    N, C, H, W = x_nchw.shape
    assert (C, H, W) == (1, 32, 32), (
        "SimpleNetFinal expects (N,1,32,32); fc1 hard-codes 400 = 16*5*5")
    x = jnp.transpose(x_nchw, (0, 2, 3, 1)).astype(jnp.float32)  # NCHW -> NHWC

    w1, b1 = _fold_conv_bn(params["conv1_w"], params["conv1_b"],
                           params["bn1_gamma"], params["bn1_beta"],
                           params["bn1_mean"], params["bn1_var"])
    x = conv_bn_relu_pool(x, w1, b1, 5, 5, 8)          # (N, 14, 14, 8)

    w2, b2 = _fold_conv_bn(params["conv2_w"], params["conv2_b"],
                           params["bn2_gamma"], params["bn2_beta"],
                           params["bn2_mean"], params["bn2_var"])
    x = conv_bn_relu_pool(x, w2, b2, 5, 5, 16)         # (N, 5, 5, 16)

    # NHWC flatten; fc1 columns were permuted to match (PyTorch NCHW semantics
    # preserved exactly). Dropout is identity in eval mode.
    x = x.reshape(N, 16 * 5 * 5)
    fw1, fb1, fw2, fb2 = _prep_fc_params(params)
    return fc_head(x, fw1, fb1, fw2, fb2, 15)          # (N, 15)


# --------------------------- pure-JAX reference ----------------------------- #

def _reference_forward(params, x_nchw, eps=BN_EPS):
    x = jnp.transpose(x_nchw, (0, 2, 3, 1)).astype(jnp.float32)

    def stage(x, w, b, g, beta, mean, var):
        k = jnp.transpose(w, (2, 3, 1, 0))             # OIHW -> HWIO
        y = jax.lax.conv_general_dilated(
            x, k, (1, 1), "VALID",
            dimension_numbers=("NHWC", "HWIO", "NHWC")) + b
        y = (y - mean) / jnp.sqrt(var + eps) * g + beta
        y = jnp.maximum(y, 0.0)
        n, h, w_, c = y.shape
        y = y[:, :h // 2 * 2, :w_ // 2 * 2, :]
        return y.reshape(n, h // 2, 2, w_ // 2, 2, c).max(axis=(2, 4))

    x = stage(x, params["conv1_w"], params["conv1_b"], params["bn1_gamma"],
              params["bn1_beta"], params["bn1_mean"], params["bn1_var"])
    x = stage(x, params["conv2_w"], params["conv2_b"], params["bn2_gamma"],
              params["bn2_beta"], params["bn2_mean"], params["bn2_var"])
    x = jnp.transpose(x, (0, 3, 1, 2)).reshape(x.shape[0], -1)  # NCHW flatten
    x = jnp.maximum(x @ params["fc1_w"].T + params["fc1_b"], 0.0)
    return x @ params["fc2_w"].T + params["fc2_b"]


# --------------------------------- main ------------------------------------ #

if __name__ == "__main__":
    key = jax.random.PRNGKey(0)
    x = jax.random.normal(key, (2, 1, 32, 32), jnp.float32)      # NCHW input
    params = init_params(jax.random.fold_in(key, 1))

    fwd = jax.jit(simple_net_final_forward)
    out = jax.block_until_ready(fwd(params, x))

    assert out.shape == (2, 15), out.shape
    assert bool(jnp.all(jnp.isfinite(out)))

    ref = _reference_forward(params, x)
    assert bool(jnp.allclose(out, ref, atol=2e-2, rtol=2e-2)), (
        float(jnp.max(jnp.abs(out - ref))))

    print("KERNEL_OK")
</pallas_src>

<mosaic_0001>
module attributes {stable_mosaic.version = 11 : i64} {
  func.func @_conv_bn_relu_pool_kernel(%arg0: i32, %arg1: memref<200x25xf32, #tpu.memory_space<vmem>>, %arg2: memref<200x25xf32, #tpu.memory_space<vmem>>, %arg3: memref<200x25xf32, #tpu.memory_space<vmem>>, %arg4: memref<200x25xf32, #tpu.memory_space<vmem>>, %arg5: memref<25x128xf32, #tpu.memory_space<vmem>>, %arg6: memref<1x128xf32, #tpu.memory_space<vmem>>, %arg7: memref<200x128xf32, #tpu.memory_space<vmem>>) attributes {dimension_semantics = [#tpu.dimension_semantics<parallel>], iteration_bounds = array<i64: 2>, scalar_prefetch = 0 : i64, scratch_operands = 0 : i64, tpu.core_type = #tpu.core_type<tc>, window_params = [{transform_indices = @transform_0, window_bounds = array<i64: 200, 25>}, {transform_indices = @transform_1, window_bounds = array<i64: 200, 25>}, {transform_indices = @transform_2, window_bounds = array<i64: 200, 25>}, {transform_indices = @transform_3, window_bounds = array<i64: 200, 25>}, {pipeline_mode = #tpu.pipeline_mode<synchronous>, transform_indices = @transform_4, window_bounds = array<i64: 25, 128>}, {pipeline_mode = #tpu.pipeline_mode<synchronous>, transform_indices = @transform_5, window_bounds = array<i64: 1, 128>}, {transform_indices = @transform_6, window_bounds = array<i64: 200, 128>}]} {
    %c0 = arith.constant 0 : index
    %c0_0 = arith.constant 0 : index
    %0 = vector.load %arg5[%c0, %c0_0] : memref<25x128xf32, #tpu.memory_space<vmem>>, vector<25x128xf32>
    %c0_1 = arith.constant 0 : index
    %c0_2 = arith.constant 0 : index
    %1 = vector.load %arg1[%c0_1, %c0_2] : memref<200x25xf32, #tpu.memory_space<vmem>>, vector<200x25xf32>
    %cst = arith.constant dense<0.000000e+00> : vector<200x128xf32>
    %2 = tpu.matmul %1, %0, %cst {dimension_numbers = #tpu.dot_dimension_numbers<[1], [0], [0], [1], [0, 0, 1, 1], [], []>} : vector<200x25xf32>, vector<25x128xf32>, vector<200x128xf32> -> vector<200x128xf32>
    %c0_3 = arith.constant 0 : index
    %c0_4 = arith.constant 0 : index
    %3 = vector.load %arg2[%c0_3, %c0_4] : memref<200x25xf32, #tpu.memory_space<vmem>>, vector<200x25xf32>
    %cst_5 = arith.constant dense<0.000000e+00> : vector<200x128xf32>
    %4 = tpu.matmul %3, %0, %cst_5 {dimension_numbers = #tpu.dot_dimension_numbers<[1], [0], [0], [1], [0, 0, 1, 1], [], []>} : vector<200x25xf32>, vector<25x128xf32>, vector<200x128xf32> -> vector<200x128xf32>
    %c0_6 = arith.constant 0 : index
    %c0_7 = arith.constant 0 : index
    %5 = vector.load %arg3[%c0_6, %c0_7] : memref<200x25xf32, #tpu.memory_space<vmem>>, vector<200x25xf32>
    %cst_8 = arith.constant dense<0.000000e+00> : vector<200x128xf32>
    %6 = tpu.matmul %5, %0, %cst_8 {dimension_numbers = #tpu.dot_dimension_numbers<[1], [0], [0], [1], [0, 0, 1, 1], [], []>} : vector<200x25xf32>, vector<25x128xf32>, vector<200x128xf32> -> vector<200x128xf32>
    %c0_9 = arith.constant 0 : index
    %c0_10 = arith.constant 0 : index
    %7 = vector.load %arg4[%c0_9, %c0_10] : memref<200x25xf32, #tpu.memory_space<vmem>>, vector<200x25xf32>
    %cst_11 = arith.constant dense<0.000000e+00> : vector<200x128xf32>
    %8 = tpu.matmul %7, %0, %cst_11 {dimension_numbers = #tpu.dot_dimension_numbers<[1], [0], [0], [1], [0, 0, 1, 1], [], []>} : vector<200x25xf32>, vector<25x128xf32>, vector<200x128xf32> -> vector<200x128xf32>
    %9 = arith.maximumf %2, %4 : vector<200x128xf32>
    %10 = arith.maximumf %6, %8 : vector<200x128xf32>
    %11 = arith.maximumf %9, %10 : vector<200x128xf32>
    %c0_12 = arith.constant 0 : index
    %c0_13 = arith.constant 0 : index
    %12 = vector.load %arg6[%c0_12, %c0_13] : memref<1x128xf32, #tpu.memory_space<vmem>>, vector<1x128xf32>
    %13 = vector.broadcast %12 : vector<1x128xf32> to vector<200x128xf32>
    %14 = arith.addf %11, %13 : vector<200x128xf32>
    %cst_14 = arith.constant 0.000000e+00 : f32
    %15 = vector.broadcast %cst_14 : f32 to vector<200x128xf32>
    %16 = arith.maximumf %14, %15 : vector<200x128xf32>
    %c0_15 = arith.constant 0 : index
    %c0_16 = arith.constant 0 : index
    %17 = vector.load %arg7[%c0_15, %c0_16] : memref<200x128xf32, #tpu.memory_space<vmem>>, vector<200x128xf32>
    tpu.vector_store %arg7[%c0_15, %c0_16], %16 {strides = array<i32>} : memref<200x128xf32, #tpu.memory_space<vmem>>, vector<200x128xf32>,
    return
  }
  func.func @transform_0(%arg0: i32) -> (i32, i32) {
    %c0_i32 = arith.constant 0 : i32
    %c0_i32_0 = arith.constant 0 : i32
    return %arg0, %c0_i32 : i32, i32
  }
  func.func @transform_1(%arg0: i32) -> (i32, i32) {
    %c0_i32 = arith.constant 0 : i32
    %c0_i32_0 = arith.constant 0 : i32
    return %arg0, %c0_i32 : i32, i32
  }
  func.func @transform_2(%arg0: i32) -> (i32, i32) {
    %c0_i32 = arith.constant 0 : i32
    %c0_i32_0 = arith.constant 0 : i32
    return %arg0, %c0_i32 : i32, i32
  }
  func.func @transform_3(%arg0: i32) -> (i32, i32) {
    %c0_i32 = arith.constant 0 : i32
    %c0_i32_0 = arith.constant 0 : i32
    return %arg0, %c0_i32 : i32, i32
  }
  func.func @transform_4(%arg0: i32) -> (i32, i32) {
    %c0_i32 = arith.constant 0 : i32
    %c0_i32_0 = arith.constant 0 : i32
    %c0_i32_1 = arith.constant 0 : i32
    return %c0_i32, %c0_i32_0 : i32, i32
  }
  func.func @transform_5(%arg0: i32) -> (i32, i32) {
    %c0_i32 = arith.constant 0 : i32
    %c0_i32_0 = arith.constant 0 : i32
    %c0_i32_1 = arith.constant 0 : i32
    return %c0_i32, %c0_i32_0 : i32, i32
  }
  func.func @transform_6(%arg0: i32) -> (i32, i32) {
    %c0_i32 = arith.constant 0 : i32
    %c0_i32_0 = arith.constant 0 : i32
    return %arg0, %c0_i32 : i32, i32
  }
}

module attributes {stable_mosaic.version = 11 : i64} {
  func.func @_conv_bn_relu_pool_kernel(%arg0: i32, %arg1: memref<56x200xf32, #tpu.memory_space<vmem>>, %arg2: memref<56x200xf32, #tpu.memory_space<vmem>>, %arg3: memref<56x200xf32, #tpu.memory_space<vmem>>, %arg4: memref<56x200xf32, #tpu.memory_space<vmem>>, %arg5: memref<200x128xf32, #tpu.memory_space<vmem>>, %arg6: memref<1x128xf32, #tpu.memory_space<vmem>>, %arg7: memref<56x128xf32, #tpu.memory_space<vmem>>) attributes {dimension_semantics = [#tpu.dimension_semantics<parallel>], iteration_bounds = array<i64: 1>, scalar_prefetch = 0 : i64, scratch_operands = 0 : i64, tpu.core_type = #tpu.core_type<tc>, window_params = [{transform_indices = @transform_0, window_bounds = array<i64: 56, 200>}, {transform_indices = @transform_1, window_bounds = array<i64: 56, 200>}, {transform_indices = @transform_2, window_bounds = array<i64: 56, 200>}, {transform_indices = @transform_3, window_bounds = array<i64: 56, 200>}, {pipeline_mode = #tpu.pipeline_mode<synchronous>, transform_indices = @transform_4, window_bounds = array<i64: 200, 128>}, {pipeline_mode = #tpu.pipeline_mode<synchronous>, transform_indices = @transform_5, window_bounds = array<i64: 1, 128>}, {transform_indices = @transform_6, window_bounds = array<i64: 56, 128>}]} {
    %c0 = arith.constant 0 : index
    %c0_0 = arith.constant 0 : index
    %0 = vector.load %arg5[%c0, %c0_0] : memref<200x128xf32, #tpu.memory_space<vmem>>, vector<200x128xf32>
    %c0_1 = arith.constant 0 : index
    %c0_2 = arith.constant 0 : index
    %1 = vector.load %arg1[%c0_1, %c0_2] : memref<56x200xf32, #tpu.memory_space<vmem>>, vector<56x200xf32>
    %cst = arith.constant dense<0.000000e+00> : vector<56x128xf32>
    %2 = tpu.matmul %1, %0, %cst {dimension_numbers = #tpu.dot_dimension_numbers<[1], [0], [0], [1], [0, 0, 1, 1], [], []>} : vector<56x200xf32>, vector<200x128xf32>, vector<56x128xf32> -> vector<56x128xf32>
    %c0_3 = arith.constant 0 : index
    %c0_4 = arith.constant 0 : index
    %3 = vector.load %arg2[%c0_3, %c0_4] : memref<56x200xf32, #tpu.memory_space<vmem>>, vector<56x200xf32>
    %cst_5 = arith.constant dense<0.000000e+00> : vector<56x128xf32>
    %4 = tpu.matmul %3, %0, %cst_5 {dimension_numbers = #tpu.dot_dimension_numbers<[1], [0], [0], [1], [0, 0, 1, 1], [], []>} : vector<56x200xf32>, vector<200x128xf32>, vector<56x128xf32> -> vector<56x128xf32>
    %c0_6 = arith.constant 0 : index
    %c0_7 = arith.constant 0 : index
    %5 = vector.load %arg3[%c0_6, %c0_7] : memref<56x200xf32, #tpu.memory_space<vmem>>, vector<56x200xf32>
    %cst_8 = arith.constant dense<0.000000e+00> : vector<56x128xf32>
    %6 = tpu.matmul %5, %0, %cst_8 {dimension_numbers = #tpu.dot_dimension_numbers<[1], [0], [0], [1], [0, 0, 1, 1], [], []>} : vector<56x200xf32>, vector<200x128xf32>, vector<56x128xf32> -> vector<56x128xf32>
    %c0_9 = arith.constant 0 : index
    %c0_10 = arith.constant 0 : index
    %7 = vector.load %arg4[%c0_9, %c0_10] : memref<56x200xf32, #tpu.memory_space<vmem>>, vector<56x200xf32>
    %cst_11 = arith.constant dense<0.000000e+00> : vector<56x128xf32>
    %8 = tpu.matmul %7, %0, %cst_11 {dimension_numbers = #tpu.dot_dimension_numbers<[1], [0], [0], [1], [0, 0, 1, 1], [], []>} : vector<56x200xf32>, vector<200x128xf32>, vector<56x128xf32> -> vector<56x128xf32>
    %9 = arith.maximumf %2, %4 : vector<56x128xf32>
    %10 = arith.maximumf %6, %8 : vector<56x128xf32>
    %11 = arith.maximumf %9, %10 : vector<56x128xf32>
    %c0_12 = arith.constant 0 : index
    %c0_13 = arith.constant 0 : index
    %12 = vector.load %arg6[%c0_12, %c0_13] : memref<1x128xf32, #tpu.memory_space<vmem>>, vector<1x128xf32>
    %13 = vector.broadcast %12 : vector<1x128xf32> to vector<56x128xf32>
    %14 = arith.addf %11, %13 : vector<56x128xf32>
    %cst_14 = arith.constant 0.000000e+00 : f32
    %15 = vector.broadcast %cst_14 : f32 to vector<56x128xf32>
    %16 = arith.maximumf %14, %15 : vector<56x128xf32>
    %c0_15 = arith.constant 0 : index
    %c0_16 = arith.constant 0 : index
    %17 = vector.load %arg7[%c0_15, %c0_16] : memref<56x128xf32, #tpu.memory_space<vmem>>, vector<56x128xf32>
    tpu.vector_store %arg7[%c0_15, %c0_16], %16 {strides = array<i32>} : memref<56x128xf32, #tpu.memory_space<vmem>>, vector<56x128xf32>,
    return
  }
  func.func @transform_0(%arg0: i32) -> (i32, i32) {
    %c0_i32 = arith.constant 0 : i32
    %c0_i32_0 = arith.constant 0 : i32
    return %arg0, %c0_i32 : i32, i32
  }
  func.func @transform_1(%arg0: i32) -> (i32, i32) {
    %c0_i32 = arith.constant 0 : i32
    %c0_i32_0 = arith.constant 0 : i32
    return %arg0, %c0_i32 : i32, i32
  }
  func.func @transform_2(%arg0: i32) -> (i32, i32) {
    %c0_i32 = arith.constant 0 : i32
    %c0_i32_0 = arith.constant 0 : i32
    return %arg0, %c0_i32 : i32, i32
  }
  func.func @transform_3(%arg0: i32) -> (i32, i32) {
    %c0_i32 = arith.constant 0 : i32
    %c0_i32_0 = arith.constant 0 : i32
    return %arg0, %c0_i32 : i32, i32
  }
  func.func @transform_4(%arg0: i32) -> (i32, i32) {
    %c0_i32 = arith.constant 0 : i32
    %c0_i32_0 = arith.constant 0 : i32
    %c0_i32_1 = arith.constant 0 : i32
    return %c0_i32, %c0_i32_0 : i32, i32
  }
  func.func @transform_5(%arg0: i32) -> (i32, i32) {
    %c0_i32 = arith.constant 0 : i32
    %c0_i32_0 = arith.constant 0 : i32
    %c0_i32_1 = arith.constant 0 : i32
    return %c0_i32, %c0_i32_0 : i32, i32
  }
  func.func @transform_6(%arg0: i32) -> (i32, i32) {
    %c0_i32 = arith.constant 0 : i32
    %c0_i32_0 = arith.constant 0 : i32
    return %arg0, %c0_i32 : i32, i32
  }
}

module attributes {stable_mosaic.version = 11 : i64} {
  func.func @_fc_head_kernel(%arg0: i32, %arg1: memref<8x400xf32, #tpu.memory_space<vmem>>, %arg2: memref<400x128xf32, #tpu.memory_space<vmem>>, %arg3: memref<1x128xf32, #tpu.memory_space<vmem>>, %arg4: memref<128x128xf32, #tpu.memory_space<vmem>>, %arg5: memref<1x128xf32, #tpu.memory_space<vmem>>, %arg6: memref<8x128xf32, #tpu.memory_space<vmem>>) attributes {dimension_semantics = [#tpu.dimension_semantics<parallel>], iteration_bounds = array<i64: 1>, scalar_prefetch = 0 : i64, scratch_operands = 0 : i64, tpu.core_type = #tpu.core_type<tc>, window_params = [{transform_indices = @transform_0, window_bounds = array<i64: 8, 400>}, {pipeline_mode = #tpu.pipeline_mode<synchronous>, transform_indices = @transform_1, window_bounds = array<i64: 400, 128>}, {pipeline_mode = #tpu.pipeline_mode<synchronous>, transform_indices = @transform_2, window_bounds = array<i64: 1, 128>}, {pipeline_mode = #tpu.pipeline_mode<synchronous>, transform_indices = @transform_3, window_bounds = array<i64: 128, 128>}, {pipeline_mode = #tpu.pipeline_mode<synchronous>, transform_indices = @transform_4, window_bounds = array<i64: 1, 128>}, {transform_indices = @transform_5, window_bounds = array<i64: 8, 128>}]} {
    %c0 = arith.constant 0 : index
    %c0_0 = arith.constant 0 : index
    %0 = vector.load %arg1[%c0, %c0_0] : memref<8x400xf32, #tpu.memory_space<vmem>>, vector<8x400xf32>
    %c0_1 = arith.constant 0 : index
    %c0_2 = arith.constant 0 : index
    %1 = vector.load %arg2[%c0_1, %c0_2] : memref<400x128xf32, #tpu.memory_space<vmem>>, vector<400x128xf32>
    %cst = arith.constant dense<0.000000e+00> : vector<8x128xf32>
    %2 = tpu.matmul %0, %1, %cst {dimension_numbers = #tpu.dot_dimension_numbers<[1], [0], [0], [1], [0, 0, 1, 1], [], []>} : vector<8x400xf32>, vector<400x128xf32>, vector<8x128xf32> -> vector<8x128xf32>
    %c0_3 = arith.constant 0 : index
    %c0_4 = arith.constant 0 : index
    %3 = vector.load %arg3[%c0_3, %c0_4] : memref<1x128xf32, #tpu.memory_space<vmem>>, vector<1x128xf32>
    %4 = vector.broadcast %3 : vector<1x128xf32> to vector<8x128xf32>
    %5 = arith.addf %2, %4 : vector<8x128xf32>
    %cst_5 = arith.constant 0.000000e+00 : f32
    %6 = vector.broadcast %cst_5 : f32 to vector<8x128xf32>
    %7 = arith.maximumf %5, %6 : vector<8x128xf32>
    %c0_6 = arith.constant 0 : index
    %c0_7 = arith.constant 0 : index
    %8 = vector.load %arg4[%c0_6, %c0_7] : memref<128x128xf32, #tpu.memory_space<vmem>>, vector<128x128xf32>
    %cst_8 = arith.constant dense<0.000000e+00> : vector<8x128xf32>
    %9 = tpu.matmul %7, %8, %cst_8 {dimension_numbers = #tpu.dot_dimension_numbers<[1], [0], [0], [1], [0, 0, 1, 1], [], []>} : vector<8x128xf32>, vector<128x128xf32>, vector<8x128xf32> -> vector<8x128xf32>
    %c0_9 = arith.constant 0 : index
    %c0_10 = arith.constant 0 : index
    %10 = vector.load %arg5[%c0_9, %c0_10] : memref<1x128xf32, #tpu.memory_space<vmem>>, vector<1x128xf32>
    %11 = vector.broadcast %10 : vector<1x128xf32> to vector<8x128xf32>
    %12 = arith.addf %9, %11 : vector<8x128xf32>
    %c0_11 = arith.constant 0 : index
    %c0_12 = arith.constant 0 : index
    %13 = vector.load %arg6[%c0_11, %c0_12] : memref<8x128xf32, #tpu.memory_space<vmem>>, vector<8x128xf32>
    tpu.vector_store %arg6[%c0_11, %c0_12], %12 {strides = array<i32>} : memref<8x128xf32, #tpu.memory_space<vmem>>, vector<8x128xf32>,
    return
  }
  func.func @transform_0(%arg0: i32) -> (i32, i32) {
    %c0_i32 = arith.constant 0 : i32
    %c0_i32_0 = arith.constant 0 : i32
    return %arg0, %c0_i32 : i32, i32
  }
  func.func @transform_1(%arg0: i32) -> (i32, i32) {
    %c0_i32 = arith.constant 0 : i32
    %c0_i32_0 = arith.constant 0 : i32
    %c0_i32_1 = arith.constant 0 : i32
    return %c0_i32, %c0_i32_0 : i32, i32
  }
  func.func @transform_2(%arg0: i32) -> (i32, i32) {
    %c0_i32 = arith.constant 0 : i32
    %c0_i32_0 = arith.constant 0 : i32
    %c0_i32_1 = arith.constant 0 : i32
    return %c0_i32, %c0_i32_0 : i32, i32
  }
  func.func @transform_3(%arg0: i32) -> (i32, i32) {
    %c0_i32 = arith.constant 0 : i32
    %c0_i32_0 = arith.constant 0 : i32
    %c0_i32_1 = arith.constant 0 : i32
    return %c0_i32, %c0_i32_0 : i32, i32
  }
  func.func @transform_4(%arg0: i32) -> (i32, i32) {
    %c0_i32 = arith.constant 0 : i32
    %c0_i32_0 = arith.constant 0 : i32
    %c0_i32_1 = arith.constant 0 : i32
    return %c0_i32, %c0_i32_0 : i32, i32
  }
  func.func @transform_5(%arg0: i32) -> (i32, i32) {
    %c0_i32 = arith.constant 0 : i32
    %c0_i32_0 = arith.constant 0 : i32
    return %arg0, %c0_i32 : i32, i32
  }
}

</mosaic_0001>

<llo_original>
// kernel: simple_net_final_forward.3
$region0: #{simple_net_final_forward.3}
  #allocation0 [shape = 'u32[]', space=smem, size = 0x4, offset = 0x4, fixed_abs, tag = 'smem constant byte address 0x4 - core index']
  #allocation1 [shape = 'u32[72,128]{1,0:T(1,128)}', space=vmem, size = 0x9000, scoped, tag = 'internal scratch']
  %s0 = inlined_call_operand.vmem [shape: f32[400,25], index: 0, kind: input, shape index: {}]
  %s1 = inlined_call_operand.vmem [shape: f32[400,25], index: 1, kind: input, shape index: {}]
  %s2 = inlined_call_operand.vmem [shape: f32[400,25], index: 2, kind: input, shape index: {}]
  %s3 = inlined_call_operand.vmem [shape: f32[400,25], index: 3, kind: input, shape index: {}]
  %s4 = inlined_call_operand.vmem [shape: f32[25,128], index: 4, kind: input, shape index: {}]
  %s5 = inlined_call_operand.vmem [shape: f32[1,128], index: 5, kind: input, shape index: {}]
  %s6 = inlined_call_operand.vmem [shape: f32[400,128], index: 6, kind: output, shape index: {}]
  %s7 = sld [smem:[#allocation0]]
  $region57: #{simple_net_final_forward.3} parent=0
    _
  %s9 = ssub.s32 1, %s7
  %s10 = scalar_select 0, %s9, %s7
  loop: start=0, step=1, limit=4
  $region2: #{simple_net_final_forward.3} parent=0 // loop_pre_header
    _
  $region3: #{simple_net_final_forward.3} parent=0 // loop_header
    %s12 = sphi 0, %s16
    %p13 = scmp.ge.s32.totalorder %s12, 4
    %s22 = sphi 0, %s24
    %s25 = sphi 0, %s22
    %s26 = sphi 0, %s25
    %s42 = sphi 0, %s26
    %s48 = sphi 0, %s50
    %s51 = sphi 0, %s48
    %s52 = sphi 0, %s51
    %s68 = sphi 0, %s52
    %s74 = sphi 0, %s76
    %s77 = sphi 0, %s74
    %s78 = sphi 0, %s77
    %s94 = sphi 0, %s78
    %s100 = sphi 0, %s102
    %s103 = sphi 0, %s100
    %s104 = sphi 0, %s103
    %s120 = sphi 0, %s104
    %s124 = sphi 0, %s124
    %s126 = sphi 0, %s124
    %s127 = sphi 0, %s126
    %s141 = sphi 0, %s127
    %s145 = sphi 0, %s145
    %s147 = sphi 0, %s145
    %s148 = sphi 0, %s147
    %s162 = sphi 0, %s148
    %s168 = sphi 0, %s170
    %s171 = sphi 0, %s168
    %s172 = sphi 0, %s171
    %s188 = sphi 0, %s172
  $region4: #{simple_net_final_forward.3} parent=0 // loop_header_branch
    %15 = sbr.rel (%p13) target = $region8
  $region5: #{simple_net_final_forward.3} parent=0 // loop_body
    %s17 = ssub.s32 %s12, 1
    %s18 = ssub.s32 %s12, 2
    %s19 = sadd.s32 %s12, 1
    %s20 = ssub.s32 %s12, %s19
    %p21 = scmp.eq.s32.totalorder %s20, 0
    %s23 = sadd.s32 %s22, 1
    %s24 = scalar_select %p21, %s22, %s23
    %p27 = pneg %p21
    %p28 = scmp.eq.s32.totalorder %s12, 1
    %p29 = por %p27, %p28
    %p30 = scmp.ne.s32.totalorder %s22, %s25
    %p31 = scmp.eq.s32.totalorder %s12, 0
    %p32 = por %p30, %p31
    %p33 = scmp.ne.s32.totalorder %s22, %s25
    %p34 = scmp.eq.s32.totalorder %s17, 1
    %p35 = por %p33, %p34
    %p36 = scmp.ne.s32.totalorder %s25, %s26
    %p37 = scmp.eq.s32.totalorder %s17, 0
    %p38 = por %p36, %p37
    %p39 = scmp.ne.s32.totalorder %s25, %s26
    %p40 = scmp.eq.s32.totalorder %s18, 1
    %p41 = por %p39, %p40
    %p43 = scmp.ne.s32.totalorder %s26, %s42
    %p44 = scmp.eq.s32.totalorder %s18, 0
    %p45 = por %p43, %p44
    %s46 = ssub.s32 %s12, %s19
    %p47 = scmp.eq.s32.totalorder %s46, 0
    %s49 = sadd.s32 %s48, 1
    %s50 = scalar_select %p47, %s48, %s49
    %p53 = pneg %p47
    %p54 = scmp.eq.s32.totalorder %s12, 1
    %p55 = por %p53, %p54
    %p56 = scmp.ne.s32.totalorder %s48, %s51
    %p57 = scmp.eq.s32.totalorder %s12, 0
    %p58 = por %p56, %p57
    %p59 = scmp.ne.s32.totalorder %s48, %s51
    %p60 = scmp.eq.s32.totalorder %s17, 1
    %p61 = por %p59, %p60
    %p62 = scmp.ne.s32.totalorder %s51, %s52
    %p63 = scmp.eq.s32.totalorder %s17, 0
    %p64 = por %p62, %p63
    %p65 = scmp.ne.s32.totalorder %s51, %s52
    %p66 = scmp.eq.s32.totalorder %s18, 1
    %p67 = por %p65, %p66
    %p69 = scmp.ne.s32.totalorder %s52, %s68
    %p70 = scmp.eq.s32.totalorder %s18, 0
    %p71 = por %p69, %p70
    %s72 = ssub.s32 %s12, %s19
    %p73 = scmp.eq.s32.totalorder %s72, 0
    %s75 = sadd.s32 %s74, 1
    %s76 = scalar_select %p73, %s74, %s75
    %p79 = pneg %p73
    %p80 = scmp.eq.s32.totalorder %s12, 1
    %p81 = por %p79, %p80
    %p82 = scmp.ne.s32.totalorder %s74, %s77
    %p83 = scmp.eq.s32.totalorder %s12, 0
    %p84 = por %p82, %p83
    %p85 = scmp.ne.s32.totalorder %s74, %s77
    %p86 = scmp.eq.s32.totalorder %s17, 1
    %p87 = por %p85, %p86
    %p88 = scmp.ne.s32.totalorder %s77, %s78
    %p89 = scmp.eq.s32.totalorder %s17, 0
    %p90 = por %p88, %p89
    %p91 = scmp.ne.s32.totalorder %s77, %s78
    %p92 = scmp.eq.s32.totalorder %s18, 1
    %p93 = por %p91, %p92
    %p95 = scmp.ne.s32.totalorder %s78, %s94
    %p96 = scmp.eq.s32.totalorder %s18, 0
    %p97 = por %p95, %p96
    %s98 = ssub.s32 %s12, %s19
    %p99 = scmp.eq.s32.totalorder %s98, 0
    %s101 = sadd.s32 %s100, 1
    %s102 = scalar_select %p99, %s100, %s101
    %p105 = pneg %p99
    %p106 = scmp.eq.s32.totalorder %s12, 1
    %p107 = por %p105, %p106
    %p108 = scmp.ne.s32.totalorder %s100, %s103
    %p109 = scmp.eq.s32.totalorder %s12, 0
    %p110 = por %p108, %p109
    %p111 = scmp.ne.s32.totalorder %s100, %s103
    %p112 = scmp.eq.s32.totalorder %s17, 1
    %p113 = por %p111, %p112
    %p114 = scmp.ne.s32.totalorder %s103, %s104
    %p115 = scmp.eq.s32.totalorder %s17, 0
    %p116 = por %p114, %p115
    %p117 = scmp.ne.s32.totalorder %s103, %s104
    %p118 = scmp.eq.s32.totalorder %s18, 1
    %p119 = por %p117, %p118
    %p121 = scmp.ne.s32.totalorder %s104, %s120
    %p122 = scmp.eq.s32.totalorder %s18, 0
    %p123 = por %p121, %p122
    %s125 = sadd.s32 %s124, 1
    %p128 = scmp.eq.s32.totalorder %s12, 1
    %p129 = scmp.ne.s32.totalorder %s124, %s126
    %p130 = scmp.eq.s32.totalorder %s12, 0
    %p131 = por %p129, %p130
    %p132 = scmp.ne.s32.totalorder %s124, %s126
    %p133 = scmp.eq.s32.totalorder %s17, 1
    %p134 = por %p132, %p133
    %p135 = scmp.ne.s32.totalorder %s126, %s127
    %p136 = scmp.eq.s32.totalorder %s17, 0
    %p137 = por %p135, %p136
    %p138 = scmp.ne.s32.totalorder %s126, %s127
    %p139 = scmp.eq.s32.totalorder %s18, 1
    %p140 = por %p138, %p139
    %p142 = scmp.ne.s32.totalorder %s127, %s141
    %p143 = scmp.eq.s32.totalorder %s18, 0
    %p144 = por %p142, %p143
    %s146 = sadd.s32 %s145, 1
    %p149 = scmp.eq.s32.totalorder %s12, 1
    %p150 = scmp.ne.s32.totalorder %s145, %s147
    %p151 = scmp.eq.s32.totalorder %s12, 0
    %p152 = por %p150, %p151
    %p153 = scmp.ne.s32.totalorder %s145, %s147
    %p154 = scmp.eq.s32.totalorder %s17, 1
    %p155 = por %p153, %p154
    %p156 = scmp.ne.s32.totalorder %s147, %s148
    %p157 = scmp.eq.s32.totalorder %s17, 0
    %p158 = por %p156, %p157
    %p159 = scmp.ne.s32.totalorder %s147, %s148
    %p160 = scmp.eq.s32.totalorder %s18, 1
    %p161 = por %p159, %p160
    %p163 = scmp.ne.s32.totalorder %s148, %s162
    %p164 = scmp.eq.s32.totalorder %s18, 0
    %p165 = por %p163, %p164
    %s166 = ssub.s32 %s12, %s19
    %p167 = scmp.eq.s32.totalorder %s166, 0
    %s169 = sadd.s32 %s168, 1
    %s170 = scalar_select %p167, %s168, %s169
    %p173 = pneg %p167
    %p174 = scmp.eq.s32.totalorder %s12, 1
    %p175 = por %p173, %p174
    %p176 = scmp.ne.s32.totalorder %s168, %s171
    %p177 = scmp.eq.s32.totalorder %s12, 0
    %p178 = por %p176, %p177
    %p179 = scmp.ne.s32.totalorder %s168, %s171
    %p180 = scmp.eq.s32.totalorder %s17, 1
    %p181 = por %p179, %p180
    %p182 = scmp.ne.s32.totalorder %s171, %s172
    %p183 = scmp.eq.s32.totalorder %s17, 0
    %p184 = por %p182, %p183
    %p185 = scmp.ne.s32.totalorder %s171, %s172
    %p186 = scmp.eq.s32.totalorder %s18, 1
    %p187 = por %p185, %p186
    %p189 = scmp.ne.s32.totalorder %s172, %s188
    %p190 = scmp.eq.s32.totalorder %s18, 0
    %p191 = por %p189, %p190
    %p192 = scmp.le.s32.totalorder 1, %s12
    %p193 = scmp.lt.s32.totalorder %s12, 3
    %p194 = pnand %p192, %p193
    %p195 = pneg %p194
    // Predicated region
    $region9: #{simple_net_final_forward.3} parent=5 // pred_check
      _
    $region10: #{simple_net_final_forward.3} parent=5 // pred_check_branch
      %197 = sbr.rel (%p194) target = $region12
    $region11: #{simple_net_final_forward.3} parent=5 // pred_region
      %s198 = ssub.s32 %s12, 1
      // Predicated region
      $region13: #{simple_net_final_forward.3} parent=11 // pred_check
        %p199 = pneg %p137
      $region14: #{simple_net_final_forward.3} parent=11 // pred_check_branch
        %201 = sbr.rel (%p199) target = $region16
      $region15: #{simple_net_final_forward.3} parent=11 // pred_region
        _
      $region16: #{simple_net_final_forward.3} parent=11 // pred_fallthru
        _
      // Predicated region
      $region17: #{simple_net_final_forward.3} parent=11 // pred_check
        %p202 = pneg %p158
      $region18: #{simple_net_final_forward.3} parent=11 // pred_check_branch
        %204 = sbr.rel (%p202) target = $region20
      $region19: #{simple_net_final_forward.3} parent=11 // pred_region
        _
      $region20: #{simple_net_final_forward.3} parent=11 // pred_fallthru
        _
    $region12: #{simple_net_final_forward.3} parent=5 // pred_fallthru
      _
    %p205 = scmp.lt.s32.totalorder %s12, 2
    // Predicated region
    $region21: #{simple_net_final_forward.3} parent=5 // pred_check
      %p206 = pneg %p205
    $region22: #{simple_net_final_forward.3} parent=5 // pred_check_branch
      %208 = sbr.rel (%p206) target = $region24
    $region23: #{simple_net_final_forward.3} parent=5 // pred_region
      // Predicated region
      $region25: #{simple_net_final_forward.3} parent=23 // pred_check
        %p209 = pneg %p32
      $region26: #{simple_net_final_forward.3} parent=23 // pred_check_branch
        %211 = sbr.rel (%p209) target = $region28
      $region27: #{simple_net_final_forward.3} parent=23 // pred_region
        %s212 = smul.u32 25, %s12
        %p213 = scmp.lt.s32.totalorder %s212, 49
        %s214 = scalar_select %p213, %s212, 49
        %s215 = smul.addr %s214, 8
        %s216 = scalar_lea.vmem %s0, %s215
        %s217 = smul.u32 25, %s12
      $region28: #{simple_net_final_forward.3} parent=23 // pred_fallthru
        _
      // Predicated region
      $region29: #{simple_net_final_forward.3} parent=23 // pred_check
        %p218 = pneg %p58
      $region30: #{simple_net_final_forward.3} parent=23 // pred_check_branch
        %220 = sbr.rel (%p218) target = $region32
      $region31: #{simple_net_final_forward.3} parent=23 // pred_region
        %s221 = smul.u32 25, %s12
        %p222 = scmp.lt.s32.totalorder %s221, 49
        %s223 = scalar_select %p222, %s221, 49
        %s224 = smul.addr %s223, 8
        %s225 = scalar_lea.vmem %s1, %s224
        %s226 = smul.u32 25, %s12
      $region32: #{simple_net_final_forward.3} parent=23 // pred_fallthru
        _
      // Predicated region
      $region33: #{simple_net_final_forward.3} parent=23 // pred_check
        %p227 = pneg %p84
      $region34: #{simple_net_final_forward.3} parent=23 // pred_check_branch
        %229 = sbr.rel (%p227) target = $region36
      $region35: #{simple_net_final_forward.3} parent=23 // pred_region
        %s230 = smul.u32 25, %s12
        %p231 = scmp.lt.s32.totalorder %s230, 49
        %s232 = scalar_select %p231, %s230, 49
        %s233 = smul.addr %s232, 8
        %s234 = scalar_lea.vmem %s2, %s233
        %s235 = smul.u32 25, %s12
      $region36: #{simple_net_final_forward.3} parent=23 // pred_fallthru
        _
      // Predicated region
      $region37: #{simple_net_final_forward.3} parent=23 // pred_check
        %p236 = pneg %p110
      $region38: #{simple_net_final_forward.3} parent=23 // pred_check_branch
        %238 = sbr.rel (%p236) target = $region40
      $region39: #{simple_net_final_forward.3} parent=23 // pred_region
        %s239 = smul.u32 25, %s12
        %p240 = scmp.lt.s32.totalorder %s239, 49
        %s241 = scalar_select %p240, %s239, 49
        %s242 = smul.addr %s241, 8
        %s243 = scalar_lea.vmem %s3, %s242
        %s244 = smul.u32 25, %s12
      $region40: #{simple_net_final_forward.3} parent=23 // pred_fallthru
        _
    $region24: #{simple_net_final_forward.3} parent=5 // pred_fallthru
      _
    %p245 = scmp.le.s32.totalorder 1, %s12
    %p246 = scmp.lt.s32.totalorder %s12, 3
    %p247 = pnand %p245, %p246
    %p248 = pneg %p247
    // Predicated region
    $region41: #{simple_net_final_forward.3} parent=5 // pred_check
      _
    $region42: #{simple_net_final_forward.3} parent=5 // pred_check_branch
      %250 = sbr.rel (%p247) target = $region44
    $region43: #{simple_net_final_forward.3} parent=5 // pred_region
      %s251 = ssub.s32 %s12, 1
      %s252 = smul.u32 25, %s17
      %p253 = scmp.lt.s32.totalorder %s252, 49
      %s254 = scalar_select %p253, %s252, 49
      %s255 = smul.addr %s254, 8
      %s256 = scalar_lea.vmem %s0, %s255
      %p257 = pneg %p38
      %p258 = pneg %p35
      %s259 = smul.u32 25, %s17
      %p260 = scmp.lt.s32.totalorder %s259, 49
      %s261 = scalar_select %p260, %s259, 49
      %s262 = smul.addr %s261, 8
      %s263 = scalar_lea.vmem %s1, %s262
      %p264 = pneg %p64
      %p265 = pneg %p61
      %s266 = smul.u32 25, %s17
      %p267 = scmp.lt.s32.totalorder %s266, 49
      %s268 = scalar_select %p267, %s266, 49
      %s269 = smul.addr %s268, 8
      %s270 = scalar_lea.vmem %s2, %s269
      %p271 = pneg %p90
      %p272 = pneg %p87
      %s273 = smul.u32 25, %s17
      %p274 = scmp.lt.s32.totalorder %s273, 49
      %s275 = scalar_select %p274, %s273, 49
      %s276 = smul.addr %s275, 8
      %s277 = scalar_lea.vmem %s3, %s276
      %p278 = pneg %p116
      %p279 = pneg %p113
      %p280 = pneg %p137
      %p281 = pneg %p134
      %p282 = pneg %p158
      %p283 = pneg %p155
      %p284 = pneg %p184
      %p285 = pneg %p181
      %s286 = smul.u32 25, %s17
      %p287 = scmp.lt.s32.totalorder %s286, 49
      %s288 = scalar_select %p287, %s286, 49
      %s289 = smul.addr %s288, 8
      %s290 = scalar_lea.vmem %s6, %s289
      %s291 = smul.u32 25, %s17
      %p292 = scmp.lt.s32.totalorder %s291, 49
      %s293 = scalar_select %p292, %s291, 49
      %s294 = smul.addr %s293, 8
      %s295 = scalar_lea.vmem %s0, %s294
      %s296 = smul.u32 25, %s17
      %s297 = smul.u32 25, %s17
      %p298 = scmp.lt.s32.totalorder %s297, 49
      %s299 = scalar_select %p298, %s297, 49
      %s300 = smul.addr %s299, 8
      %s301 = scalar_lea.vmem %s1, %s300
      %s302 = smul.u32 25, %s17
      %s303 = smul.u32 25, %s17
      %p304 = scmp.lt.s32.totalorder %s303, 49
      %s305 = scalar_select %p304, %s303, 49
      %s306 = smul.addr %s305, 8
      %s307 = scalar_lea.vmem %s2, %s306
      %s308 = smul.u32 25, %s17
      %s309 = smul.u32 25, %s17
      %p310 = scmp.lt.s32.totalorder %s309, 49
      %s311 = scalar_select %p310, %s309, 49
      %s312 = smul.addr %s311, 8
      %s313 = scalar_lea.vmem %s3, %s312
      %s314 = smul.u32 25, %s17
      %s315 = smul.u32 25, %s17
      %p316 = scmp.lt.s32.totalorder %s315, 49
      %s317 = scalar_select %p316, %s315, 49
      %s318 = smul.addr %s317, 8
      %s319 = scalar_lea.vmem %s6, %s318
      %s320 = smul.u32 25, %s17
      %v321 = vld [vmem:[%s4] sm:$0xff]
      %v322 = vld [vmem:[%s4 + $0x8] sm:$0xff]
      %v323 = vld [vmem:[%s4 + $0x10] sm:$0xff]
      %v324 = vld [vmem:[%s4 + $0x18] sm:$0x1]
      %v325 = vld [vmem:[%s295] sm:$0xff]
      %v326 = vld [vmem:[%s295 + $0x8] sm:$0xff]
      %v327 = vld [vmem:[%s295 + $0x10] sm:$0xff]
      %v328 = vld [vmem:[%s295 + $0x18] sm:$0xff]
      %v329 = vld [vmem:[%s295 + $0x20] sm:$0xff]
      %v330 = vld [vmem:[%s295 + $0x28] sm:$0xff]
      %v331 = vld [vmem:[%s295 + $0x30] sm:$0xff]
      %v332 = vld [vmem:[%s295 + $0x38] sm:$0xff]
      %v333 = vld [vmem:[%s295 + $0x40] sm:$0xff]
      %v334 = vld [vmem:[%s295 + $0x48] sm:$0xff]
      %v335 = vld [vmem:[%s295 + $0x50] sm:$0xff]
      %v336 = vld [vmem:[%s295 + $0x58] sm:$0xff]
      %v337 = vld [vmem:[%s295 + $0x60] sm:$0xff]
      %v338 = vld [vmem:[%s295 + $0x68] sm:$0xff]
      %v339 = vld [vmem:[%s295 + $0x70] sm:$0xff]
      %v340 = vld [vmem:[%s295 + $0x78] sm:$0xff]
      %v341 = vld [vmem:[%s295 + $0x80] sm:$0xff]
      %v342 = vld [vmem:[%s295 + $0x88] sm:$0xff]
      %v343 = vld [vmem:[%s295 + $0x90] sm:$0xff]
      %v344 = vld [vmem:[%s295 + $0x98] sm:$0xff]
      %v345 = vld [vmem:[%s295 + $0xa0] sm:$0xff]
      %v346 = vld [vmem:[%s295 + $0xa8] sm:$0xff]
      %v347 = vld [vmem:[%s295 + $0xb0] sm:$0xff]
      %v348 = vld [vmem:[%s295 + $0xb8] sm:$0xff]
      %v349 = vld [vmem:[%s295 + $0xc0] sm:$0xff]
      %vm350 = vcmask 203776
      %v352 = vsel %vm350, %v325, 0
      %v355 = vsel %vm350, %v326, 0
      %v358 = vsel %vm350, %v327, 0
      %v361 = vsel %vm350, %v328, 0
      %v364 = vsel %vm350, %v329, 0
      %v367 = vsel %vm350, %v330, 0
      %v370 = vsel %vm350, %v331, 0
      %v373 = vsel %vm350, %v332, 0
      %v376 = vsel %vm350, %v333, 0
      %v379 = vsel %vm350, %v334, 0
      %v382 = vsel %vm350, %v335, 0
      %v385 = vsel %vm350, %v336, 0
      %v388 = vsel %vm350, %v337, 0
      %v391 = vsel %vm350, %v338, 0
      %v394 = vsel %vm350, %v339, 0
      %v397 = vsel %vm350, %v340, 0
      %v400 = vsel %vm350, %v341, 0
      %v403 = vsel %vm350, %v342, 0
      %v406 = vsel %vm350, %v343, 0
      %v409 = vsel %vm350, %v344, 0
      %v412 = vsel %vm350, %v345, 0
      %v415 = vsel %vm350, %v346, 0
      %v418 = vsel %vm350, %v347, 0
      %v421 = vsel %vm350, %v348, 0
      %v424 = vsel %vm350, %v349, 0
      %vm426 = vcmask 1040384
      %v428 = vsel %vm426, %v324, 0
      %430 = vmatpush.msra.mxu0 0.0
      %431 = vmatpush.msra.mxu0 0.0
      %432 = vmatpush.msra.mxu0 0.0
      %433 = vmatpush.msra.mxu0 0.0
      %434 = vmatpush.msra.mxu0 0.0
      %435 = vmatpush.msra.mxu0 0.0
      %436 = vmatpush.msra.mxu0 0.0
      %437 = vmatpush.msra.mxu0 0.0
      %438 = vmatpush.msra.mxu0 0.0
      %439 = vmatpush.msra.mxu0 0.0
      %440 = vmatpush.msra.mxu0 0.0
      %441 = vmatpush.msra.mxu0 0.0
      %442 = vmatpush.msra.mxu0 %v428
      %443 = vmatpush.msra.mxu0 %v323
      %444 = vmatpush.msra.mxu0 %v322
      %445 = vmatpush.msra.mxu0 %v321
      %446 = vmatmul.f32.gmra.mxu0 %v352
      %v447 = vpop.f32.mrf.mxu0
      %v448 = vadd.f32 0.0, %v447
      %449 = vmatmul.f32.gmra.mxu0 %v355
      %v450 = vpop.f32.mrf.mxu0
      %v451 = vadd.f32 0.0, %v450
      %452 = vmatmul.f32.gmra.mxu0 %v358
      %v453 = vpop.f32.mrf.mxu0
      %v454 = vadd.f32 0.0, %v453
      %455 = vmatmul.f32.gmra.mxu0 %v361
      %v456 = vpop.f32.mrf.mxu0
      %v457 = vadd.f32 0.0, %v456
      %458 = vmatmul.f32.gmra.mxu0 %v364
      %v459 = vpop.f32.mrf.mxu0
      %v460 = vadd.f32 0.0, %v459
      %461 = vmatmul.f32.gmra.mxu0 %v367
      %v462 = vpop.f32.mrf.mxu0
      %v463 = vadd.f32 0.0, %v462
      %464 = vmatmul.f32.gmra.mxu0 %v370
      %v465 = vpop.f32.mrf.mxu0
      %v466 = vadd.f32 0.0, %v465
      %467 = vmatmul.f32.gmra.mxu0 %v373
      %v468 = vpop.f32.mrf.mxu0
      %v469 = vadd.f32 0.0, %v468
      %470 = vmatmul.f32.gmra.mxu0 %v376
      %v471 = vpop.f32.mrf.mxu0
      %v472 = vadd.f32 0.0, %v471
      %473 = vmatmul.f32.gmra.mxu0 %v379
      %v474 = vpop.f32.mrf.mxu0
      %v475 = vadd.f32 0.0, %v474
      %476 = vmatmul.f32.gmra.mxu0 %v382
      %v477 = vpop.f32.mrf.mxu0
      %v478 = vadd.f32 0.0, %v477
      %479 = vmatmul.f32.gmra.mxu0 %v385
      %v480 = vpop.f32.mrf.mxu0
      %v481 = vadd.f32 0.0, %v480
      %482 = vmatmul.f32.gmra.mxu0 %v388
      %v483 = vpop.f32.mrf.mxu0
      %v484 = vadd.f32 0.0, %v483
      %485 = vmatmul.f32.gmra.mxu0 %v391
      %v486 = vpop.f32.mrf.mxu0
      %v487 = vadd.f32 0.0, %v486
      %488 = vmatmul.f32.gmra.mxu0 %v394
      %v489 = vpop.f32.mrf.mxu0
      %v490 = vadd.f32 0.0, %v489
      %491 = vmatmul.f32.gmra.mxu0 %v397
      %v492 = vpop.f32.mrf.mxu0
      %v493 = vadd.f32 0.0, %v492
      %494 = vmatmul.f32.gmra.mxu0 %v400
      %v495 = vpop.f32.mrf.mxu0
      %v496 = vadd.f32 0.0, %v495
      %497 = vmatmul.f32.gmra.mxu0 %v403
      %v498 = vpop.f32.mrf.mxu0
      %v499 = vadd.f32 0.0, %v498
      %500 = vmatmul.f32.gmra.mxu0 %v406
      %v501 = vpop.f32.mrf.mxu0
      %v502 = vadd.f32 0.0, %v501
      %503 = vmatmul.f32.gmra.mxu0 %v409
      %v504 = vpop.f32.mrf.mxu0
      %v505 = vadd.f32 0.0, %v504
      %506 = vmatmul.f32.gmra.mxu0 %v412
      %v507 = vpop.f32.mrf.mxu0
      %v508 = vadd.f32 0.0, %v507
      %509 = vmatmul.f32.gmra.mxu0 %v415
      %v510 = vpop.f32.mrf.mxu0
      %v511 = vadd.f32 0.0, %v510
      %512 = vmatmul.f32.gmra.mxu0 %v418
      %v513 = vpop.f32.mrf.mxu0
      %v514 = vadd.f32 0.0, %v513
      %515 = vmatmul.f32.gmra.mxu0 %v421
      %v516 = vpop.f32.mrf.mxu0
      %v517 = vadd.f32 0.0, %v516
      %518 = vmatmul.f32.gmra.mxu0 %v424
      %v519 = vpop.f32.mrf.mxu0
      %v520 = vadd.f32 0.0, %v519
      %521 = vdwg.mxu0
      %v522 = vld [vmem:[%s301] sm:$0xff]
      %v523 = vld [vmem:[%s301 + $0x8] sm:$0xff]
      %v524 = vld [vmem:[%s301 + $0x10] sm:$0xff]
      %v525 = vld [vmem:[%s301 + $0x18] sm:$0xff]
      %v526 = vld [vmem:[%s301 + $0x20] sm:$0xff]
      %v527 = vld [vmem:[%s301 + $0x28] sm:$0xff]
      %v528 = vld [vmem:[%s301 + $0x30] sm:$0xff]
      %v529 = vld [vmem:[%s301 + $0x38] sm:$0xff]
      %v530 = vld [vmem:[%s301 + $0x40] sm:$0xff]
      %v531 = vld [vmem:[%s301 + $0x48] sm:$0xff]
      %v532 = vld [vmem:[%s301 + $0x50] sm:$0xff]
      %v533 = vld [vmem:[%s301 + $0x58] sm:$0xff]
      %v534 = vld [vmem:[%s301 + $0x60] sm:$0xff]
      %v535 = vld [vmem:[%s301 + $0x68] sm:$0xff]
      %v536 = vld [vmem:[%s301 + $0x70] sm:$0xff]
      %v537 = vld [vmem:[%s301 + $0x78] sm:$0xff]
      %v538 = vld [vmem:[%s301 + $0x80] sm:$0xff]
      %v539 = vld [vmem:[%s301 + $0x88] sm:$0xff]
      %v540 = vld [vmem:[%s301 + $0x90] sm:$0xff]
      %v541 = vld [vmem:[%s301 + $0x98] sm:$0xff]
      %v542 = vld [vmem:[%s301 + $0xa0] sm:$0xff]
      %v543 = vld [vmem:[%s301 + $0xa8] sm:$0xff]
      %v544 = vld [vmem:[%s301 + $0xb0] sm:$0xff]
      %v545 = vld [vmem:[%s301 + $0xb8] sm:$0xff]
      %v546 = vld [vmem:[%s301 + $0xc0] sm:$0xff]
      %v548 = vsel %vm350, %v522, 0
      %v551 = vsel %vm350, %v523, 0
      %v554 = vsel %vm350, %v524, 0
      %v557 = vsel %vm350, %v525, 0
      %v560 = vsel %vm350, %v526, 0
      %v563 = vsel %vm350, %v527, 0
      %v566 = vsel %vm350, %v528, 0
      %v569 = vsel %vm350, %v529, 0
      %v572 = vsel %vm350, %v530, 0
      %v575 = vsel %vm350, %v531, 0
      %v578 = vsel %vm350, %v532, 0
      %v581 = vsel %vm350, %v533, 0
      %v584 = vsel %vm350, %v534, 0
      %v587 = vsel %vm350, %v535, 0
      %v590 = vsel %vm350, %v536, 0
      %v593 = vsel %vm350, %v537, 0
      %v596 = vsel %vm350, %v538, 0
      %v599 = vsel %vm350, %v539, 0
      %v602 = vsel %vm350, %v540, 0
      %v605 = vsel %vm350, %v541, 0
      %v608 = vsel %vm350, %v542, 0
      %v611 = vsel %vm350, %v543, 0
      %v614 = vsel %vm350, %v544, 0
      %v617 = vsel %vm350, %v545, 0
      %v620 = vsel %vm350, %v546, 0
      %622 = vmatpush.msra.mxu0 0.0
      %623 = vmatpush.msra.mxu0 0.0
      %624 = vmatpush.msra.mxu0 0.0
      %625 = vmatpush.msra.mxu0 0.0
      %626 = vmatpush.msra.mxu0 0.0
      %627 = vmatpush.msra.mxu0 0.0
      %628 = vmatpush.msra.mxu0 0.0
      %629 = vmatpush.msra.mxu0 0.0
      %630 = vmatpush.msra.mxu0 0.0
      %631 = vmatpush.msra.mxu0 0.0
      %632 = vmatpush.msra.mxu0 0.0
      %633 = vmatpush.msra.mxu0 0.0
      %634 = vmatpush.msra.mxu0 %v428
      %635 = vmatpush.msra.mxu0 %v323
      %636 = vmatpush.msra.mxu0 %v322
      %637 = vmatpush.msra.mxu0 %v321
      %638 = vmatmul.f32.gmra.mxu0 %v548
      %v639 = vpop.f32.mrf.mxu0
      %v640 = vadd.f32 0.0, %v639
      %641 = vmatmul.f32.gmra.mxu0 %v551
      %v642 = vpop.f32.mrf.mxu0
      %v643 = vadd.f32 0.0, %v642
      %644 = vmatmul.f32.gmra.mxu0 %v554
      %v645 = vpop.f32.mrf.mxu0
      %v646 = vadd.f32 0.0, %v645
      %647 = vmatmul.f32.gmra.mxu0 %v557
      %v648 = vpop.f32.mrf.mxu0
      %v649 = vadd.f32 0.0, %v648
      %650 = vmatmul.f32.gmra.mxu0 %v560
      %v651 = vpop.f32.mrf.mxu0
      %v652 = vadd.f32 0.0, %v651
      %653 = vmatmul.f32.gmra.mxu0 %v563
      %v654 = vpop.f32.mrf.mxu0
      %v655 = vadd.f32 0.0, %v654
      %656 = vmatmul.f32.gmra.mxu0 %v566
      %v657 = vpop.f32.mrf.mxu0
      %v658 = vadd.f32 0.0, %v657
      %659 = vmatmul.f32.gmra.mxu0 %v569
      %v660 = vpop.f32.mrf.mxu0
      %v661 = vadd.f32 0.0, %v660
      %662 = vmatmul.f32.gmra.mxu0 %v572
      %v663 = vpop.f32.mrf.mxu0
      %v664 = vadd.f32 0.0, %v663
      %665 = vmatmul.f32.gmra.mxu0 %v575
      %v666 = vpop.f32.mrf.mxu0
      %v667 = vadd.f32 0.0, %v666
      %668 = vmatmul.f32.gmra.mxu0 %v578
      %v669 = vpop.f32.mrf.mxu0
      %v670 = vadd.f32 0.0, %v669
      %671 = vmatmul.f32.gmra.mxu0 %v581
      %v672 = vpop.f32.mrf.mxu0
      %v673 = vadd.f32 0.0, %v672
      %674 = vmatmul.f32.gmra.mxu0 %v584
      %v675 = vpop.f32.mrf.mxu0
      %v676 = vadd.f32 0.0, %v675
      %677 = vmatmul.f32.gmra.mxu0 %v587
      %v678 = vpop.f32.mrf.mxu0
      %v679 = vadd.f32 0.0, %v678
      %680 = vmatmul.f32.gmra.mxu0 %v590
      %v681 = vpop.f32.mrf.mxu0
      %v682 = vadd.f32 0.0, %v681
      %683 = vmatmul.f32.gmra.mxu0 %v593
      %v684 = vpop.f32.mrf.mxu0
      %v685 = vadd.f32 0.0, %v684
      %686 = vmatmul.f32.gmra.mxu0 %v596
      %v687 = vpop.f32.mrf.mxu0
      %v688 = vadd.f32 0.0, %v687
      %689 = vmatmul.f32.gmra.mxu0 %v599
      %v690 = vpop.f32.mrf.mxu0
      %v691 = vadd.f32 0.0, %v690
      %692 = vmatmul.f32.gmra.mxu0 %v602
      %v693 = vpop.f32.mrf.mxu0
      %v694 = vadd.f32 0.0, %v693
      %695 = vmatmul.f32.gmra.mxu0 %v605
      %v696 = vpop.f32.mrf.mxu0
      %v697 = vadd.f32 0.0, %v696
      %698 = vmatmul.f32.gmra.mxu0 %v608
      %v699 = vpop.f32.mrf.mxu0
      %v700 = vadd.f32 0.0, %v699
      %701 = vmatmul.f32.gmra.mxu0 %v611
      %v702 = vpop.f32.mrf.mxu0
      %v703 = vadd.f32 0.0, %v702
      %704 = vmatmul.f32.gmra.mxu0 %v614
      %v705 = vpop.f32.mrf.mxu0
      %v706 = vadd.f32 0.0, %v705
      %707 = vmatmul.f32.gmra.mxu0 %v617
      %v708 = vpop.f32.mrf.mxu0
      %v709 = vadd.f32 0.0, %v708
      %710 = vmatmul.f32.gmra.mxu0 %v620
      %v711 = vpop.f32.mrf.mxu0
      %v712 = vadd.f32 0.0, %v711
      %713 = vdwg.mxu0
      %v714 = vld [vmem:[%s307] sm:$0xff]
      %v715 = vld [vmem:[%s307 + $0x8] sm:$0xff]
      %v716 = vld [vmem:[%s307 + $0x10] sm:$0xff]
      %v717 = vld [vmem:[%s307 + $0x18] sm:$0xff]
      %v718 = vld [vmem:[%s307 + $0x20] sm:$0xff]
      %v719 = vld [vmem:[%s307 + $0x28] sm:$0xff]
      %v720 = vld [vmem:[%s307 + $0x30] sm:$0xff]
      %v721 = vld [vmem:[%s307 + $0x38] sm:$0xff]
      %v722 = vld [vmem:[%s307 + $0x40] sm:$0xff]
      %v723 = vld [vmem:[%s307 + $0x48] sm:$0xff]
      %v724 = vld [vmem:[%s307 + $0x50] sm:$0xff]
      %v725 = vld [vmem:[%s307 + $0x58] sm:$0xff]
      %v726 = vld [vmem:[%s307 + $0x60] sm:$0xff]
      %v727 = vld [vmem:[%s307 + $0x68] sm:$0xff]
      %v728 = vld [vmem:[%s307 + $0x70] sm:$0xff]
      %v729 = vld [vmem:[%s307 + $0x78] sm:$0xff]
      %v730 = vld [vmem:[%s307 + $0x80] sm:$0xff]
      %v731 = vld [vmem:[%s307 + $0x88] sm:$0xff]
      %v732 = vld [vmem:[%s307 + $0x90] sm:$0xff]
      %v733 = vld [vmem:[%s307 + $0x98] sm:$0xff]
      %v734 = vld [vmem:[%s307 + $0xa0] sm:$0xff]
      %v735 = vld [vmem:[%s307 + $0xa8] sm:$0xff]
      %v736 = vld [vmem:[%s307 + $0xb0] sm:$0xff]
      %v737 = vld [vmem:[%s307 + $0xb8] sm:$0xff]
      %v738 = vld [vmem:[%s307 + $0xc0] sm:$0xff]
      %v740 = vsel %vm350, %v714, 0
      %v743 = vsel %vm350, %v715, 0
      %v746 = vsel %vm350, %v716, 0
      %v749 = vsel %vm350, %v717, 0
      %v752 = vsel %vm350, %v718, 0
      %v755 = vsel %vm350, %v719, 0
      %v758 = vsel %vm350, %v720, 0
      %v761 = vsel %vm350, %v721, 0
      %v764 = vsel %vm350, %v722, 0
      %v767 = vsel %vm350, %v723, 0
      %v770 = vsel %vm350, %v724, 0
      %v773 = vsel %vm350, %v725, 0
      %v776 = vsel %vm350, %v726, 0
      %v779 = vsel %vm350, %v727, 0
      %v782 = vsel %vm350, %v728, 0
      %v785 = vsel %vm350, %v729, 0
      %v788 = vsel %vm350, %v730, 0
      %v791 = vsel %vm350, %v731, 0
      %v794 = vsel %vm350, %v732, 0
      %v797 = vsel %vm350, %v733, 0
      %v800 = vsel %vm350, %v734, 0
      %v803 = vsel %vm350, %v735, 0
      %v806 = vsel %vm350, %v736, 0
      %v809 = vsel %vm350, %v737, 0
      %v812 = vsel %vm350, %v738, 0
      %814 = vmatpush.msra.mxu0 0.0
      %815 = vmatpush.msra.mxu0 0.0
      %816 = vmatpush.msra.mxu0 0.0
      %817 = vmatpush.msra.mxu0 0.0
      %818 = vmatpush.msra.mxu0 0.0
      %819 = vmatpush.msra.mxu0 0.0
      %820 = vmatpush.msra.mxu0 0.0
      %821 = vmatpush.msra.mxu0 0.0
      %822 = vmatpush.msra.mxu0 0.0
      %823 = vmatpush.msra.mxu0 0.0
      %824 = vmatpush.msra.mxu0 0.0
      %825 = vmatpush.msra.mxu0 0.0
      %826 = vmatpush.msra.mxu0 %v428
      %827 = vmatpush.msra.mxu0 %v323
      %828 = vmatpush.msra.mxu0 %v322
      %829 = vmatpush.msra.mxu0 %v321
      %830 = vmatmul.f32.gmra.mxu0 %v740
      %v831 = vpop.f32.mrf.mxu0
      %v832 = vadd.f32 0.0, %v831
      %833 = vmatmul.f32.gmra.mxu0 %v743
      %v834 = vpop.f32.mrf.mxu0
      %v835 = vadd.f32 0.0, %v834
      %836 = vmatmul.f32.gmra.mxu0 %v746
      %v837 = vpop.f32.mrf.mxu0
      %v838 = vadd.f32 0.0, %v837
      %839 = vmatmul.f32.gmra.mxu0 %v749
      %v840 = vpop.f32.mrf.mxu0
      %v841 = vadd.f32 0.0, %v840
      %842 = vmatmul.f32.gmra.mxu0 %v752
      %v843 = vpop.f32.mrf.mxu0
      %v844 = vadd.f32 0.0, %v843
      %845 = vmatmul.f32.gmra.mxu0 %v755
      %v846 = vpop.f32.mrf.mxu0
      %v847 = vadd.f32 0.0, %v846
      %848 = vmatmul.f32.gmra.mxu0 %v758
      %v849 = vpop.f32.mrf.mxu0
      %v850 = vadd.f32 0.0, %v849
      %851 = vmatmul.f32.gmra.mxu0 %v761
      %v852 = vpop.f32.mrf.mxu0
      %v853 = vadd.f32 0.0, %v852
      %854 = vmatmul.f32.gmra.mxu0 %v764
      %v855 = vpop.f32.mrf.mxu0
      %v856 = vadd.f32 0.0, %v855
      %857 = vmatmul.f32.gmra.mxu0 %v767
      %v858 = vpop.f32.mrf.mxu0
      %v859 = vadd.f32 0.0, %v858
      %860 = vmatmul.f32.gmra.mxu0 %v770
      %v861 = vpop.f32.mrf.mxu0
      %v862 = vadd.f32 0.0, %v861
      %863 = vmatmul.f32.gmra.mxu0 %v773
      %v864 = vpop.f32.mrf.mxu0
      %v865 = vadd.f32 0.0, %v864
      %866 = vmatmul.f32.gmra.mxu0 %v776
      %v867 = vpop.f32.mrf.mxu0
      %v868 = vadd.f32 0.0, %v867
      %869 = vmatmul.f32.gmra.mxu0 %v779
      %v870 = vpop.f32.mrf.mxu0
      %v871 = vadd.f32 0.0, %v870
      %872 = vmatmul.f32.gmra.mxu0 %v782
      %v873 = vpop.f32.mrf.mxu0
      %v874 = vadd.f32 0.0, %v873
      %875 = vmatmul.f32.gmra.mxu0 %v785
      %v876 = vpop.f32.mrf.mxu0
      %v877 = vadd.f32 0.0, %v876
      %878 = vmatmul.f32.gmra.mxu0 %v788
      %v879 = vpop.f32.mrf.mxu0
      %v880 = vadd.f32 0.0, %v879
      %881 = vmatmul.f32.gmra.mxu0 %v791
      %v882 = vpop.f32.mrf.mxu0
      %v883 = vadd.f32 0.0, %v882
      %884 = vmatmul.f32.gmra.mxu0 %v794
      %v885 = vpop.f32.mrf.mxu0
      %v886 = vadd.f32 0.0, %v885
      %887 = vmatmul.f32.gmra.mxu0 %v797
      %v888 = vpop.f32.mrf.mxu0
      %v889 = vadd.f32 0.0, %v888
      %890 = vmatmul.f32.gmra.mxu0 %v800
      %v891 = vpop.f32.mrf.mxu0
      %v892 = vadd.f32 0.0, %v891
      %893 = vmatmul.f32.gmra.mxu0 %v803
      %v894 = vpop.f32.mrf.mxu0
      %v895 = vadd.f32 0.0, %v894
      %896 = vmatmul.f32.gmra.mxu0 %v806
      %v897 = vpop.f32.mrf.mxu0
      %v898 = vadd.f32 0.0, %v897
      %899 = vmatmul.f32.gmra.mxu0 %v809
      %v900 = vpop.f32.mrf.mxu0
      %v901 = vadd.f32 0.0, %v900
      %902 = vmatmul.f32.gmra.mxu0 %v812
      %v903 = vpop.f32.mrf.mxu0
      %v904 = vadd.f32 0.0, %v903
      %905 = vdwg.mxu0
      %v906 = vld [vmem:[%s313] sm:$0xff]
      %v907 = vld [vmem:[%s313 + $0x8] sm:$0xff]
      %v908 = vld [vmem:[%s313 + $0x10] sm:$0xff]
      %v909 = vld [vmem:[%s313 + $0x18] sm:$0xff]
      %v910 = vld [vmem:[%s313 + $0x20] sm:$0xff]
      %v911 = vld [vmem:[%s313 + $0x28] sm:$0xff]
      %v912 = vld [vmem:[%s313 + $0x30] sm:$0xff]
      %v913 = vld [vmem:[%s313 + $0x38] sm:$0xff]
      %v914 = vld [vmem:[%s313 + $0x40] sm:$0xff]
      %v915 = vld [vmem:[%s313 + $0x48] sm:$0xff]
      %v916 = vld [vmem:[%s313 + $0x50] sm:$0xff]
      %v917 = vld [vmem:[%s313 + $0x58] sm:$0xff]
      %v918 = vld [vmem:[%s313 + $0x60] sm:$0xff]
      %v919 = vld [vmem:[%s313 + $0x68] sm:$0xff]
      %v920 = vld [vmem:[%s313 + $0x70] sm:$0xff]
      %v921 = vld [vmem:[%s313 + $0x78] sm:$0xff]
      %v922 = vld [vmem:[%s313 + $0x80] sm:$0xff]
      %v923 = vld [vmem:[%s313 + $0x88] sm:$0xff]
      %v924 = vld [vmem:[%s313 + $0x90] sm:$0xff]
      %v925 = vld [vmem:[%s313 + $0x98] sm:$0xff]
      %v926 = vld [vmem:[%s313 + $0xa0] sm:$0xff]
      %v927 = vld [vmem:[%s313 + $0xa8] sm:$0xff]
      %v928 = vld [vmem:[%s313 + $0xb0] sm:$0xff]
      %v929 = vld [vmem:[%s313 + $0xb8] sm:$0xff]
      %v930 = vld [vmem:[%s313 + $0xc0] sm:$0xff]
      %v932 = vsel %vm350, %v906, 0
      %v935 = vsel %vm350, %v907, 0
      %v938 = vsel %vm350, %v908, 0
      %v941 = vsel %vm350, %v909, 0
      %v944 = vsel %vm350, %v910, 0
      %v947 = vsel %vm350, %v911, 0
      %v950 = vsel %vm350, %v912, 0
      %v953 = vsel %vm350, %v913, 0
      %v956 = vsel %vm350, %v914, 0
      %v959 = vsel %vm350, %v915, 0
      %v962 = vsel %vm350, %v916, 0
      %v965 = vsel %vm350, %v917, 0
      %v968 = vsel %vm350, %v918, 0
      %v971 = vsel %vm350, %v919, 0
      %v974 = vsel %vm350, %v920, 0
      %v977 = vsel %vm350, %v921, 0
      %v980 = vsel %vm350, %v922, 0
      %v983 = vsel %vm350, %v923, 0
      %v986 = vsel %vm350, %v924, 0
      %v989 = vsel %vm350, %v925, 0
      %v992 = vsel %vm350, %v926, 0
      %v995 = vsel %vm350, %v927, 0
      %v998 = vsel %vm350, %v928, 0
      %v1001 = vsel %vm350, %v929, 0
      %v1004 = vsel %vm350, %v930, 0
      %1006 = vmatpush.msra.mxu0 0.0
      %1007 = vmatpush.msra.mxu0 0.0
      %1008 = vmatpush.msra.mxu0 0.0
      %1009 = vmatpush.msra.mxu0 0.0
      %1010 = vmatpush.msra.mxu0 0.0
      %1011 = vmatpush.msra.mxu0 0.0
      %1012 = vmatpush.msra.mxu0 0.0
      %1013 = vmatpush.msra.mxu0 0.0
      %1014 = vmatpush.msra.mxu0 0.0
      %1015 = vmatpush.msra.mxu0 0.0
      %1016 = vmatpush.msra.mxu0 0.0
      %1017 = vmatpush.msra.mxu0 0.0
      %1018 = vmatpush.msra.mxu0 %v428
      %1019 = vmatpush.msra.mxu0 %v323
      %1020 = vmatpush.msra.mxu0 %v322
      %1021 = vmatpush.msra.mxu0 %v321
      %1022 = vmatmul.f32.gmra.mxu0 %v932
      %v1023 = vpop.f32.mrf.mxu0
      %v1024 = vadd.f32 0.0, %v1023
      %1025 = vmatmul.f32.gmra.mxu0 %v935
      %v1026 = vpop.f32.mrf.mxu0
      %v1027 = vadd.f32 0.0, %v1026
      %1028 = vmatmul.f32.gmra.mxu0 %v938
      %v1029 = vpop.f32.mrf.mxu0
      %v1030 = vadd.f32 0.0, %v1029
      %1031 = vmatmul.f32.gmra.mxu0 %v941
      %v1032 = vpop.f32.mrf.mxu0
      %v1033 = vadd.f32 0.0, %v1032
      %1034 = vmatmul.f32.gmra.mxu0 %v944
      %v1035 = vpop.f32.mrf.mxu0
      %v1036 = vadd.f32 0.0, %v1035
      %1037 = vmatmul.f32.gmra.mxu0 %v947
      %v1038 = vpop.f32.mrf.mxu0
      %v1039 = vadd.f32 0.0, %v1038
      %1040 = vmatmul.f32.gmra.mxu0 %v950
      %v1041 = vpop.f32.mrf.mxu0
      %v1042 = vadd.f32 0.0, %v1041
      %1043 = vmatmul.f32.gmra.mxu0 %v953
      %v1044 = vpop.f32.mrf.mxu0
      %v1045 = vadd.f32 0.0, %v1044
      %1046 = vmatmul.f32.gmra.mxu0 %v956
      %v1047 = vpop.f32.mrf.mxu0
      %v1048 = vadd.f32 0.0, %v1047
      %1049 = vmatmul.f32.gmra.mxu0 %v959
      %v1050 = vpop.f32.mrf.mxu0
      %v1051 = vadd.f32 0.0, %v1050
      %1052 = vmatmul.f32.gmra.mxu0 %v962
      %v1053 = vpop.f32.mrf.mxu0
      %v1054 = vadd.f32 0.0, %v1053
      %1055 = vmatmul.f32.gmra.mxu0 %v965
      %v1056 = vpop.f32.mrf.mxu0
      %v1057 = vadd.f32 0.0, %v1056
      %1058 = vmatmul.f32.gmra.mxu0 %v968
      %v1059 = vpop.f32.mrf.mxu0
      %v1060 = vadd.f32 0.0, %v1059
      %1061 = vmatmul.f32.gmra.mxu0 %v971
      %v1062 = vpop.f32.mrf.mxu0
      %v1063 = vadd.f32 0.0, %v1062
      %1064 = vmatmul.f32.gmra.mxu0 %v974
      %v1065 = vpop.f32.mrf.mxu0
      %v1066 = vadd.f32 0.0, %v1065
      %1067 = vmatmul.f32.gmra.mxu0 %v977
      %v1068 = vpop.f32.mrf.mxu0
      %v1069 = vadd.f32 0.0, %v1068
      %1070 = vmatmul.f32.gmra.mxu0 %v980
      %v1071 = vpop.f32.mrf.mxu0
      %v1072 = vadd.f32 0.0, %v1071
      %1073 = vmatmul.f32.gmra.mxu0 %v983
      %v1074 = vpop.f32.mrf.mxu0
      %v1075 = vadd.f32 0.0, %v1074
      %1076 = vmatmul.f32.gmra.mxu0 %v986
      %v1077 = vpop.f32.mrf.mxu0
      %v1078 = vadd.f32 0.0, %v1077
      %1079 = vmatmul.f32.gmra.mxu0 %v989
      %v1080 = vpop.f32.mrf.mxu0
      %v1081 = vadd.f32 0.0, %v1080
      %1082 = vmatmul.f32.gmra.mxu0 %v992
      %v1083 = vpop.f32.mrf.mxu0
      %v1084 = vadd.f32 0.0, %v1083
      %1085 = vmatmul.f32.gmra.mxu0 %v995
      %v1086 = vpop.f32.mrf.mxu0
      %v1087 = vadd.f32 0.0, %v1086
      %1088 = vmatmul.f32.gmra.mxu0 %v998
      %v1089 = vpop.f32.mrf.mxu0
      %v1090 = vadd.f32 0.0, %v1089
      %1091 = vmatmul.f32.gmra.mxu0 %v1001
      %v1092 = vpop.f32.mrf.mxu0
      %v1093 = vadd.f32 0.0, %v1092
      %1094 = vmatmul.f32.gmra.mxu0 %v1004
      %v1095 = vpop.f32.mrf.mxu0
      %v1096 = vadd.f32 0.0, %v1095
      %1097 = vdwg.mxu0
      %v1098 = vmax.f32 %v448, %v640
      %v1099 = vmax.f32 %v451, %v643
      %v1100 = vmax.f32 %v454, %v646
      %v1101 = vmax.f32 %v457, %v649
      %v1102 = vmax.f32 %v460, %v652
      %v1103 = vmax.f32 %v463, %v655
      %v1104 = vmax.f32 %v466, %v658
      %v1105 = vmax.f32 %v469, %v661
      %v1106 = vmax.f32 %v472, %v664
      %v1107 = vmax.f32 %v475, %v667
      %v1108 = vmax.f32 %v478, %v670
      %v1109 = vmax.f32 %v481, %v673
      %v1110 = vmax.f32 %v484, %v676
      %v1111 = vmax.f32 %v487, %v679
      %v1112 = vmax.f32 %v490, %v682
      %v1113 = vmax.f32 %v493, %v685
      %v1114 = vmax.f32 %v496, %v688
      %v1115 = vmax.f32 %v499, %v691
      %v1116 = vmax.f32 %v502, %v694
      %v1117 = vmax.f32 %v505, %v697
      %v1118 = vmax.f32 %v508, %v700
      %v1119 = vmax.f32 %v511, %v703
      %v1120 = vmax.f32 %v514, %v706
      %v1121 = vmax.f32 %v517, %v709
      %v1122 = vmax.f32 %v520, %v712
      %v1123 = vmax.f32 %v832, %v1024
      %v1124 = vmax.f32 %v835, %v1027
      %v1125 = vmax.f32 %v838, %v1030
      %v1126 = vmax.f32 %v841, %v1033
      %v1127 = vmax.f32 %v844, %v1036
      %v1128 = vmax.f32 %v847, %v1039
      %v1129 = vmax.f32 %v850, %v1042
      %v1130 = vmax.f32 %v853, %v1045
      %v1131 = vmax.f32 %v856, %v1048
      %v1132 = vmax.f32 %v859, %v1051
      %v1133 = vmax.f32 %v862, %v1054
      %v1134 = vmax.f32 %v865, %v1057
      %v1135 = vmax.f32 %v868, %v1060
      %v1136 = vmax.f32 %v871, %v1063
      %v1137 = vmax.f32 %v874, %v1066
      %v1138 = vmax.f32 %v877, %v1069
      %v1139 = vmax.f32 %v880, %v1072
      %v1140 = vmax.f32 %v883, %v1075
      %v1141 = vmax.f32 %v886, %v1078
      %v1142 = vmax.f32 %v889, %v1081
      %v1143 = vmax.f32 %v892, %v1084
      %v1144 = vmax.f32 %v895, %v1087
      %v1145 = vmax.f32 %v898, %v1090
      %v1146 = vmax.f32 %v901, %v1093
      %v1147 = vmax.f32 %v904, %v1096
      %v1148 = vmax.f32 %v1098, %v1123
      %v1149 = vmax.f32 %v1099, %v1124
      %v1150 = vmax.f32 %v1100, %v1125
      %v1151 = vmax.f32 %v1101, %v1126
      %v1152 = vmax.f32 %v1102, %v1127
      %v1153 = vmax.f32 %v1103, %v1128
      %v1154 = vmax.f32 %v1104, %v1129
      %v1155 = vmax.f32 %v1105, %v1130
      %v1156 = vmax.f32 %v1106, %v1131
      %v1157 = vmax.f32 %v1107, %v1132
      %v1158 = vmax.f32 %v1108, %v1133
      %v1159 = vmax.f32 %v1109, %v1134
      %v1160 = vmax.f32 %v1110, %v1135
      %v1161 = vmax.f32 %v1111, %v1136
      %v1162 = vmax.f32 %v1112, %v1137
      %v1163 = vmax.f32 %v1113, %v1138
      %v1164 = vmax.f32 %v1114, %v1139
      %v1165 = vmax.f32 %v1115, %v1140
      %v1166 = vmax.f32 %v1116, %v1141
      %v1167 = vmax.f32 %v1117, %v1142
      %v1168 = vmax.f32 %v1118, %v1143
      %v1169 = vmax.f32 %v1119, %v1144
      %v1170 = vmax.f32 %v1120, %v1145
      %v1171 = vmax.f32 %v1121, %v1146
      %v1172 = vmax.f32 %v1122, %v1147
      %v1173 = vld [vmem:[%s5] sm:$0x1]
      %v1175 = vperm.slane %v1173, 0
      %v1177 = vadd.f32 %v1148, %v1175
      %v1178 = vadd.f32 %v1149, %v1175
      %v1179 = vadd.f32 %v1150, %v1175
      %v1180 = vadd.f32 %v1151, %v1175
      %v1181 = vadd.f32 %v1152, %v1175
      %v1182 = vadd.f32 %v1153, %v1175
      %v1183 = vadd.f32 %v1154, %v1175
      %v1184 = vadd.f32 %v1155, %v1175
      %v1185 = vadd.f32 %v1156, %v1175
      %v1186 = vadd.f32 %v1157, %v1175
      %v1187 = vadd.f32 %v1158, %v1175
      %v1188 = vadd.f32 %v1159, %v1175
      %v1189 = vadd.f32 %v1160, %v1175
      %v1190 = vadd.f32 %v1161, %v1175
      %v1191 = vadd.f32 %v1162, %v1175
      %v1192 = vadd.f32 %v1163, %v1175
      %v1193 = vadd.f32 %v1164, %v1175
      %v1194 = vadd.f32 %v1165, %v1175
      %v1195 = vadd.f32 %v1166, %v1175
      %v1196 = vadd.f32 %v1167, %v1175
      %v1197 = vadd.f32 %v1168, %v1175
      %v1198 = vadd.f32 %v1169, %v1175
      %v1199 = vadd.f32 %v1170, %v1175
      %v1200 = vadd.f32 %v1171, %v1175
      %v1201 = vadd.f32 %v1172, %v1175
      %v1202 = vmax.f32 %v1177, 0.0
      %v1203 = vmax.f32 %v1178, 0.0
      %v1204 = vmax.f32 %v1179, 0.0
      %v1205 = vmax.f32 %v1180, 0.0
      %v1206 = vmax.f32 %v1181, 0.0
      %v1207 = vmax.f32 %v1182, 0.0
      %v1208 = vmax.f32 %v1183, 0.0
      %v1209 = vmax.f32 %v1184, 0.0
      %v1210 = vmax.f32 %v1185, 0.0
      %v1211 = vmax.f32 %v1186, 0.0
      %v1212 = vmax.f32 %v1187, 0.0
      %v1213 = vmax.f32 %v1188, 0.0
      %v1214 = vmax.f32 %v1189, 0.0
      %v1215 = vmax.f32 %v1190, 0.0
      %v1216 = vmax.f32 %v1191, 0.0
      %v1217 = vmax.f32 %v1192, 0.0
      %v1218 = vmax.f32 %v1193, 0.0
      %v1219 = vmax.f32 %v1194, 0.0
      %v1220 = vmax.f32 %v1195, 0.0
      %v1221 = vmax.f32 %v1196, 0.0
      %v1222 = vmax.f32 %v1197, 0.0
      %v1223 = vmax.f32 %v1198, 0.0
      %v1224 = vmax.f32 %v1199, 0.0
      %v1225 = vmax.f32 %v1200, 0.0
      %v1226 = vmax.f32 %v1201, 0.0
      %1227 = vst [vmem:[%s319] sm:$0xff] %v1202
      %1228 = vst [vmem:[%s319 + $0x8] sm:$0xff] %v1203
      %1229 = vst [vmem:[%s319 + $0x10] sm:$0xff] %v1204
      %1230 = vst [vmem:[%s319 + $0x18] sm:$0xff] %v1205
      %1231 = vst [vmem:[%s319 + $0x20] sm:$0xff] %v1206
      %1232 = vst [vmem:[%s319 + $0x28] sm:$0xff] %v1207
      %1233 = vst [vmem:[%s319 + $0x30] sm:$0xff] %v1208
      %1234 = vst [vmem:[%s319 + $0x38] sm:$0xff] %v1209
      %1235 = vst [vmem:[%s319 + $0x40] sm:$0xff] %v1210
      %1236 = vst [vmem:[%s319 + $0x48] sm:$0xff] %v1211
      %1237 = vst [vmem:[%s319 + $0x50] sm:$0xff] %v1212
      %1238 = vst [vmem:[%s319 + $0x58] sm:$0xff] %v1213
      %1239 = vst [vmem:[%s319 + $0x60] sm:$0xff] %v1214
      %1240 = vst [vmem:[%s319 + $0x68] sm:$0xff] %v1215
      %1241 = vst [vmem:[%s319 + $0x70] sm:$0xff] %v1216
      %1242 = vst [vmem:[%s319 + $0x78] sm:$0xff] %v1217
      %1243 = vst [vmem:[%s319 + $0x80] sm:$0xff] %v1218
      %1244 = vst [vmem:[%s319 + $0x88] sm:$0xff] %v1219
      %1245 = vst [vmem:[%s319 + $0x90] sm:$0xff] %v1220
      %1246 = vst [vmem:[%s319 + $0x98] sm:$0xff] %v1221
      %1247 = vst [vmem:[%s319 + $0xa0] sm:$0xff] %v1222
      %1248 = vst [vmem:[%s319 + $0xa8] sm:$0xff] %v1223
      %1249 = vst [vmem:[%s319 + $0xb0] sm:$0xff] %v1224
      %1250 = vst [vmem:[%s319 + $0xb8] sm:$0xff] %v1225
      %1251 = vst [vmem:[%s319 + $0xc0] sm:$0xff] %v1226
      %s1252 = smul.u32 25, %s17
      %p1253 = scmp.lt.s32.totalorder %s1252, 49
      %s1254 = scalar_select %p1253, %s1252, 49
      %s1255 = smul.addr %s1254, 8
      %s1256 = scalar_lea.vmem %s6, %s1255
      // Predicated region
      $region45: #{simple_net_final_forward.3} parent=43 // pred_check
        %p1257 = pneg %p181
      $region46: #{simple_net_final_forward.3} parent=43 // pred_check_branch
        %1259 = sbr.rel (%p1257) target = $region48
      $region47: #{simple_net_final_forward.3} parent=43 // pred_region
        %s1260 = smul.u32 25, %s17
      $region48: #{simple_net_final_forward.3} parent=43 // pred_fallthru
        _
    $region44: #{simple_net_final_forward.3} parent=5 // pred_fallthru
      _
    %p1261 = scmp.le.s32.totalorder 2, %s12
    // Predicated region
    $region49: #{simple_net_final_forward.3} parent=5 // pred_check
      %p1262 = pneg %p1261
    $region50: #{simple_net_final_forward.3} parent=5 // pred_check_branch
      %1264 = sbr.rel (%p1262) target = $region52
    $region51: #{simple_net_final_forward.3} parent=5 // pred_region
      %s1265 = ssub.s32 %s12, 2
      // Predicated region
      $region53: #{simple_net_final_forward.3} parent=51 // pred_check
        %p1266 = pneg %p187
      $region54: #{simple_net_final_forward.3} parent=51 // pred_check_branch
        %1268 = sbr.rel (%p1266) target = $region56
      $region55: #{simple_net_final_forward.3} parent=51 // pred_region
        %s1269 = smul.u32 25, %s18
        %p1270 = scmp.lt.s32.totalorder %s1269, 49
        %s1271 = scalar_select %p1270, %s1269, 49
        %s1272 = smul.addr %s1271, 8
        %s1273 = scalar_lea.vmem %s6, %s1272
      $region56: #{simple_net_final_forward.3} parent=51 // pred_fallthru
        _
    $region52: #{simple_net_final_forward.3} parent=5 // pred_fallthru
      _
  $region6: #{simple_net_final_forward.3} parent=0 // loop_footer
    %s16 = sadd.s32 1, %s12
  $region7: #{simple_net_final_forward.3} parent=0 // loop_footer_branch
    %11 = sbr.rel target = $region3
  $region8: #{simple_net_final_forward.3} parent=0 // loop_exit
    _

// kernel: simple_net_final_forward.4
$region0: #{simple_net_final_forward.4}
  #allocation0 [shape = 'u32[]', space=smem, size = 0x4, offset = 0x4, fixed_abs, tag = 'smem constant byte address 0x4 - core index']
  #allocation1 [shape = 'u32[72,128]{1,0:T(1,128)}', space=vmem, size = 0x9000, scoped, tag = 'internal scratch']
  %s0 = inlined_call_operand.vmem [shape: f32[56,200], index: 0, kind: input, shape index: {}]
  %s1 = inlined_call_operand.vmem [shape: f32[56,200], index: 1, kind: input, shape index: {}]
  %s2 = inlined_call_operand.vmem [shape: f32[56,200], index: 2, kind: input, shape index: {}]
  %s3 = inlined_call_operand.vmem [shape: f32[56,200], index: 3, kind: input, shape index: {}]
  %s4 = inlined_call_operand.vmem [shape: f32[200,128], index: 4, kind: input, shape index: {}]
  %s5 = inlined_call_operand.vmem [shape: f32[1,128], index: 5, kind: input, shape index: {}]
  %s6 = inlined_call_operand.vmem [shape: f32[56,128], index: 6, kind: output, shape index: {}]
  %s7 = sld [smem:[#allocation0]]
  $region34: #{simple_net_final_forward.4} parent=0
    _
  %s9 = ssub.s32 1, %s7
  %s10 = scalar_select 0, %s9, %s7
  // Predicated region
  $region2: #{simple_net_final_forward.4} parent=0 // pred_check
    _
  $region3: #{simple_net_final_forward.4} parent=0 // pred_check_branch
    %12 = sbr.rel (0) target = $region5
  $region4: #{simple_net_final_forward.4} parent=0 // pred_region
    _
  $region5: #{simple_net_final_forward.4} parent=0 // pred_fallthru
    _
  // Predicated region
  $region6: #{simple_net_final_forward.4} parent=0 // pred_check
    _
  $region7: #{simple_net_final_forward.4} parent=0 // pred_check_branch
    %14 = sbr.rel (0) target = $region9
  $region8: #{simple_net_final_forward.4} parent=0 // pred_region
    _
  $region9: #{simple_net_final_forward.4} parent=0 // pred_fallthru
    _
  // Predicated region
  $region10: #{simple_net_final_forward.4} parent=0 // pred_check
    _
  $region11: #{simple_net_final_forward.4} parent=0 // pred_check_branch
    %16 = sbr.rel (0) target = $region13
  $region12: #{simple_net_final_forward.4} parent=0 // pred_region
    _
  $region13: #{simple_net_final_forward.4} parent=0 // pred_fallthru
    _
  // Predicated region
  $region14: #{simple_net_final_forward.4} parent=0 // pred_check
    _
  $region15: #{simple_net_final_forward.4} parent=0 // pred_check_branch
    %18 = sbr.rel (0) target = $region17
  $region16: #{simple_net_final_forward.4} parent=0 // pred_region
    _
  $region17: #{simple_net_final_forward.4} parent=0 // pred_fallthru
    _
  // Predicated region
  $region18: #{simple_net_final_forward.4} parent=0 // pred_check
    _
  $region19: #{simple_net_final_forward.4} parent=0 // pred_check_branch
    %20 = sbr.rel (0) target = $region21
  $region20: #{simple_net_final_forward.4} parent=0 // pred_region
    _
  $region21: #{simple_net_final_forward.4} parent=0 // pred_fallthru
    _
  // Predicated region
  $region22: #{simple_net_final_forward.4} parent=0 // pred_check
    _
  $region23: #{simple_net_final_forward.4} parent=0 // pred_check_branch
    %22 = sbr.rel (0) target = $region25
  $region24: #{simple_net_final_forward.4} parent=0 // pred_region
    _
  $region25: #{simple_net_final_forward.4} parent=0 // pred_fallthru
    _
  %v23 = vld [vmem:[%s4] sm:$0xff]
  %v24 = vld [vmem:[%s4 + $0x8] sm:$0xff]
  %v25 = vld [vmem:[%s4 + $0x10] sm:$0xff]
  %v26 = vld [vmem:[%s4 + $0x18] sm:$0xff]
  %v27 = vld [vmem:[%s4 + $0x20] sm:$0xff]
  %v28 = vld [vmem:[%s4 + $0x28] sm:$0xff]
  %v29 = vld [vmem:[%s4 + $0x30] sm:$0xff]
  %v30 = vld [vmem:[%s4 + $0x38] sm:$0xff]
  %v31 = vld [vmem:[%s4 + $0x40] sm:$0xff]
  %v32 = vld [vmem:[%s4 + $0x48] sm:$0xff]
  %v33 = vld [vmem:[%s4 + $0x50] sm:$0xff]
  %v34 = vld [vmem:[%s4 + $0x58] sm:$0xff]
  %v35 = vld [vmem:[%s4 + $0x60] sm:$0xff]
  %v36 = vld [vmem:[%s4 + $0x68] sm:$0xff]
  %v37 = vld [vmem:[%s4 + $0x70] sm:$0xff]
  %v38 = vld [vmem:[%s4 + $0x78] sm:$0xff]
  %v39 = vld [vmem:[%s4 + $0x80] sm:$0xff]
  %v40 = vld [vmem:[%s4 + $0x88] sm:$0xff]
  %v41 = vld [vmem:[%s4 + $0x90] sm:$0xff]
  %v42 = vld [vmem:[%s4 + $0x98] sm:$0xff]
  %v43 = vld [vmem:[%s4 + $0xa0] sm:$0xff]
  %v44 = vld [vmem:[%s4 + $0xa8] sm:$0xff]
  %v45 = vld [vmem:[%s4 + $0xb0] sm:$0xff]
  %v46 = vld [vmem:[%s4 + $0xb8] sm:$0xff]
  %v47 = vld [vmem:[%s4 + $0xc0] sm:$0xff]
  %v48 = vld [vmem:[%s0] sm:$0xff]
  %v49 = vld [vmem:[%s0 + $0x8] sm:$0xff]
  %v50 = vld [vmem:[%s0 + $0x10] sm:$0xff]
  %v51 = vld [vmem:[%s0 + $0x18] sm:$0xff]
  %v52 = vld [vmem:[%s0 + $0x20] sm:$0xff]
  %v53 = vld [vmem:[%s0 + $0x28] sm:$0xff]
  %v54 = vld [vmem:[%s0 + $0x30] sm:$0xff]
  %v55 = vld [vmem:[%s0 + $0x38] sm:$0xff]
  %v56 = vld [vmem:[%s0 + $0x40] sm:$0xff]
  %v57 = vld [vmem:[%s0 + $0x48] sm:$0xff]
  %v58 = vld [vmem:[%s0 + $0x50] sm:$0xff]
  %v59 = vld [vmem:[%s0 + $0x58] sm:$0xff]
  %v60 = vld [vmem:[%s0 + $0x60] sm:$0xff]
  %v61 = vld [vmem:[%s0 + $0x68] sm:$0xff]
  %vm62 = vcmask 588800
  %v64 = vsel %vm62, %v49, 0
  %v67 = vsel %vm62, %v51, 0
  %v70 = vsel %vm62, %v53, 0
  %v73 = vsel %vm62, %v55, 0
  %v76 = vsel %vm62, %v57, 0
  %v79 = vsel %vm62, %v59, 0
  %v82 = vsel %vm62, %v61, 0
  %84 = vmatpush.msra.mxu0 %v38
  %85 = vmatpush.msra.mxu0 %v37
  %86 = vmatpush.msra.mxu0 %v36
  %87 = vmatpush.msra.mxu0 %v35
  %88 = vmatpush.msra.mxu0 %v34
  %89 = vmatpush.msra.mxu0 %v33
  %90 = vmatpush.msra.mxu0 %v32
  %91 = vmatpush.msra.mxu0 %v31
  %92 = vmatpush.msra.mxu0 %v30
  %93 = vmatpush.msra.mxu0 %v29
  %94 = vmatpush.msra.mxu0 %v28
  %95 = vmatpush.msra.mxu0 %v27
  %96 = vmatpush.msra.mxu0 %v26
  %97 = vmatpush.msra.mxu0 %v25
  %98 = vmatpush.msra.mxu0 %v24
  %99 = vmatpush.msra.mxu0 %v23
  %100 = vmatmul.f32.gmra.mxu0 %v48
  %v101 = vpop.f32.mrf.mxu0
  %v102 = vadd.f32 0.0, %v101
  %103 = vmatmul.f32.gmra.mxu0 %v50
  %v104 = vpop.f32.mrf.mxu0
  %v105 = vadd.f32 0.0, %v104
  %106 = vmatmul.f32.gmra.mxu0 %v52
  %v107 = vpop.f32.mrf.mxu0
  %v108 = vadd.f32 0.0, %v107
  %109 = vmatmul.f32.gmra.mxu0 %v54
  %v110 = vpop.f32.mrf.mxu0
  %v111 = vadd.f32 0.0, %v110
  %112 = vmatmul.f32.gmra.mxu0 %v56
  %v113 = vpop.f32.mrf.mxu0
  %v114 = vadd.f32 0.0, %v113
  %115 = vmatmul.f32.gmra.mxu0 %v58
  %v116 = vpop.f32.mrf.mxu0
  %v117 = vadd.f32 0.0, %v116
  %118 = vmatmul.f32.gmra.mxu0 %v60
  %v119 = vpop.f32.mrf.mxu0
  %v120 = vadd.f32 0.0, %v119
  %121 = vdwg.mxu0
  %122 = vmatpush.msra.mxu0 0.0
  %123 = vmatpush.msra.mxu0 0.0
  %124 = vmatpush.msra.mxu0 0.0
  %125 = vmatpush.msra.mxu0 0.0
  %126 = vmatpush.msra.mxu0 0.0
  %127 = vmatpush.msra.mxu0 0.0
  %128 = vmatpush.msra.mxu0 0.0
  %129 = vmatpush.msra.mxu0 %v47
  %130 = vmatpush.msra.mxu0 %v46
  %131 = vmatpush.msra.mxu0 %v45
  %132 = vmatpush.msra.mxu0 %v44
  %133 = vmatpush.msra.mxu0 %v43
  %134 = vmatpush.msra.mxu0 %v42
  %135 = vmatpush.msra.mxu0 %v41
  %136 = vmatpush.msra.mxu0 %v40
  %137 = vmatpush.msra.mxu0 %v39
  %138 = vmatmul.f32.gmra.mxu0 %v64
  %v139 = vpop.f32.mrf.mxu0
  %v140 = vadd.f32 %v102, %v139
  %141 = vmatmul.f32.gmra.mxu0 %v67
  %v142 = vpop.f32.mrf.mxu0
  %v143 = vadd.f32 %v105, %v142
  %144 = vmatmul.f32.gmra.mxu0 %v70
  %v145 = vpop.f32.mrf.mxu0
  %v146 = vadd.f32 %v108, %v145
  %147 = vmatmul.f32.gmra.mxu0 %v73
  %v148 = vpop.f32.mrf.mxu0
  %v149 = vadd.f32 %v111, %v148
  %150 = vmatmul.f32.gmra.mxu0 %v76
  %v151 = vpop.f32.mrf.mxu0
  %v152 = vadd.f32 %v114, %v151
  %153 = vmatmul.f32.gmra.mxu0 %v79
  %v154 = vpop.f32.mrf.mxu0
  %v155 = vadd.f32 %v117, %v154
  %156 = vmatmul.f32.gmra.mxu0 %v82
  %v157 = vpop.f32.mrf.mxu0
  %v158 = vadd.f32 %v120, %v157
  %159 = vdwg.mxu0
  %v160 = vld [vmem:[%s1] sm:$0xff]
  %v161 = vld [vmem:[%s1 + $0x8] sm:$0xff]
  %v162 = vld [vmem:[%s1 + $0x10] sm:$0xff]
  %v163 = vld [vmem:[%s1 + $0x18] sm:$0xff]
  %v164 = vld [vmem:[%s1 + $0x20] sm:$0xff]
  %v165 = vld [vmem:[%s1 + $0x28] sm:$0xff]
  %v166 = vld [vmem:[%s1 + $0x30] sm:$0xff]
  %v167 = vld [vmem:[%s1 + $0x38] sm:$0xff]
  %v168 = vld [vmem:[%s1 + $0x40] sm:$0xff]
  %v169 = vld [vmem:[%s1 + $0x48] sm:$0xff]
  %v170 = vld [vmem:[%s1 + $0x50] sm:$0xff]
  %v171 = vld [vmem:[%s1 + $0x58] sm:$0xff]
  %v172 = vld [vmem:[%s1 + $0x60] sm:$0xff]
  %v173 = vld [vmem:[%s1 + $0x68] sm:$0xff]
  %v175 = vsel %vm62, %v161, 0
  %v178 = vsel %vm62, %v163, 0
  %v181 = vsel %vm62, %v165, 0
  %v184 = vsel %vm62, %v167, 0
  %v187 = vsel %vm62, %v169, 0
  %v190 = vsel %vm62, %v171, 0
  %v193 = vsel %vm62, %v173, 0
  %195 = vmatpush.msra.mxu0 %v38
  %196 = vmatpush.msra.mxu0 %v37
  %197 = vmatpush.msra.mxu0 %v36
  %198 = vmatpush.msra.mxu0 %v35
  %199 = vmatpush.msra.mxu0 %v34
  %200 = vmatpush.msra.mxu0 %v33
  %201 = vmatpush.msra.mxu0 %v32
  %202 = vmatpush.msra.mxu0 %v31
  %203 = vmatpush.msra.mxu0 %v30
  %204 = vmatpush.msra.mxu0 %v29
  %205 = vmatpush.msra.mxu0 %v28
  %206 = vmatpush.msra.mxu0 %v27
  %207 = vmatpush.msra.mxu0 %v26
  %208 = vmatpush.msra.mxu0 %v25
  %209 = vmatpush.msra.mxu0 %v24
  %210 = vmatpush.msra.mxu0 %v23
  %211 = vmatmul.f32.gmra.mxu0 %v160
  %v212 = vpop.f32.mrf.mxu0
  %v213 = vadd.f32 0.0, %v212
  %214 = vmatmul.f32.gmra.mxu0 %v162
  %v215 = vpop.f32.mrf.mxu0
  %v216 = vadd.f32 0.0, %v215
  %217 = vmatmul.f32.gmra.mxu0 %v164
  %v218 = vpop.f32.mrf.mxu0
  %v219 = vadd.f32 0.0, %v218
  %220 = vmatmul.f32.gmra.mxu0 %v166
  %v221 = vpop.f32.mrf.mxu0
  %v222 = vadd.f32 0.0, %v221
  %223 = vmatmul.f32.gmra.mxu0 %v168
  %v224 = vpop.f32.mrf.mxu0
  %v225 = vadd.f32 0.0, %v224
  %226 = vmatmul.f32.gmra.mxu0 %v170
  %v227 = vpop.f32.mrf.mxu0
  %v228 = vadd.f32 0.0, %v227
  %229 = vmatmul.f32.gmra.mxu0 %v172
  %v230 = vpop.f32.mrf.mxu0
  %v231 = vadd.f32 0.0, %v230
  %232 = vdwg.mxu0
  %233 = vmatpush.msra.mxu0 0.0
  %234 = vmatpush.msra.mxu0 0.0
  %235 = vmatpush.msra.mxu0 0.0
  %236 = vmatpush.msra.mxu0 0.0
  %237 = vmatpush.msra.mxu0 0.0
  %238 = vmatpush.msra.mxu0 0.0
  %239 = vmatpush.msra.mxu0 0.0
  %240 = vmatpush.msra.mxu0 %v47
  %241 = vmatpush.msra.mxu0 %v46
  %242 = vmatpush.msra.mxu0 %v45
  %243 = vmatpush.msra.mxu0 %v44
  %244 = vmatpush.msra.mxu0 %v43
  %245 = vmatpush.msra.mxu0 %v42
  %246 = vmatpush.msra.mxu0 %v41
  %247 = vmatpush.msra.mxu0 %v40
  %248 = vmatpush.msra.mxu0 %v39
  %249 = vmatmul.f32.gmra.mxu0 %v175
  %v250 = vpop.f32.mrf.mxu0
  %v251 = vadd.f32 %v213, %v250
  %252 = vmatmul.f32.gmra.mxu0 %v178
  %v253 = vpop.f32.mrf.mxu0
  %v254 = vadd.f32 %v216, %v253
  %255 = vmatmul.f32.gmra.mxu0 %v181
  %v256 = vpop.f32.mrf.mxu0
  %v257 = vadd.f32 %v219, %v256
  %258 = vmatmul.f32.gmra.mxu0 %v184
  %v259 = vpop.f32.mrf.mxu0
  %v260 = vadd.f32 %v222, %v259
  %261 = vmatmul.f32.gmra.mxu0 %v187
  %v262 = vpop.f32.mrf.mxu0
  %v263 = vadd.f32 %v225, %v262
  %264 = vmatmul.f32.gmra.mxu0 %v190
  %v265 = vpop.f32.mrf.mxu0
  %v266 = vadd.f32 %v228, %v265
  %267 = vmatmul.f32.gmra.mxu0 %v193
  %v268 = vpop.f32.mrf.mxu0
  %v269 = vadd.f32 %v231, %v268
  %270 = vdwg.mxu0
  %v271 = vld [vmem:[%s2] sm:$0xff]
  %v272 = vld [vmem:[%s2 + $0x8] sm:$0xff]
  %v273 = vld [vmem:[%s2 + $0x10] sm:$0xff]
  %v274 = vld [vmem:[%s2 + $0x18] sm:$0xff]
  %v275 = vld [vmem:[%s2 + $0x20] sm:$0xff]
  %v276 = vld [vmem:[%s2 + $0x28] sm:$0xff]
  %v277 = vld [vmem:[%s2 + $0x30] sm:$0xff]
  %v278 = vld [vmem:[%s2 + $0x38] sm:$0xff]
  %v279 = vld [vmem:[%s2 + $0x40] sm:$0xff]
  %v280 = vld [vmem:[%s2 + $0x48] sm:$0xff]
  %v281 = vld [vmem:[%s2 + $0x50] sm:$0xff]
  %v282 = vld [vmem:[%s2 + $0x58] sm:$0xff]
  %v283 = vld [vmem:[%s2 + $0x60] sm:$0xff]
  %v284 = vld [vmem:[%s2 + $0x68] sm:$0xff]
  %v286 = vsel %vm62, %v272, 0
  %v289 = vsel %vm62, %v274, 0
  %v292 = vsel %vm62, %v276, 0
  %v295 = vsel %vm62, %v278, 0
  %v298 = vsel %vm62, %v280, 0
  %v301 = vsel %vm62, %v282, 0
  %v304 = vsel %vm62, %v284, 0
  %306 = vmatpush.msra.mxu0 %v38
  %307 = vmatpush.msra.mxu0 %v37
  %308 = vmatpush.msra.mxu0 %v36
  %309 = vmatpush.msra.mxu0 %v35
  %310 = vmatpush.msra.mxu0 %v34
  %311 = vmatpush.msra.mxu0 %v33
  %312 = vmatpush.msra.mxu0 %v32
  %313 = vmatpush.msra.mxu0 %v31
  %314 = vmatpush.msra.mxu0 %v30
  %315 = vmatpush.msra.mxu0 %v29
  %316 = vmatpush.msra.mxu0 %v28
  %317 = vmatpush.msra.mxu0 %v27
  %318 = vmatpush.msra.mxu0 %v26
  %319 = vmatpush.msra.mxu0 %v25
  %320 = vmatpush.msra.mxu0 %v24
  %321 = vmatpush.msra.mxu0 %v23
  %322 = vmatmul.f32.gmra.mxu0 %v271
  %v323 = vpop.f32.mrf.mxu0
  %v324 = vadd.f32 0.0, %v323
  %325 = vmatmul.f32.gmra.mxu0 %v273
  %v326 = vpop.f32.mrf.mxu0
  %v327 = vadd.f32 0.0, %v326
  %328 = vmatmul.f32.gmra.mxu0 %v275
  %v329 = vpop.f32.mrf.mxu0
  %v330 = vadd.f32 0.0, %v329
  %331 = vmatmul.f32.gmra.mxu0 %v277
  %v332 = vpop.f32.mrf.mxu0
  %v333 = vadd.f32 0.0, %v332
  %334 = vmatmul.f32.gmra.mxu0 %v279
  %v335 = vpop.f32.mrf.mxu0
  %v336 = vadd.f32 0.0, %v335
  %337 = vmatmul.f32.gmra.mxu0 %v281
  %v338 = vpop.f32.mrf.mxu0
  %v339 = vadd.f32 0.0, %v338
  %340 = vmatmul.f32.gmra.mxu0 %v283
  %v341 = vpop.f32.mrf.mxu0
  %v342 = vadd.f32 0.0, %v341
  %343 = vdwg.mxu0
  %344 = vmatpush.msra.mxu0 0.0
  %345 = vmatpush.msra.mxu0 0.0
  %346 = vmatpush.msra.mxu0 0.0
  %347 = vmatpush.msra.mxu0 0.0
  %348 = vmatpush.msra.mxu0 0.0
  %349 = vmatpush.msra.mxu0 0.0
  %350 = vmatpush.msra.mxu0 0.0
  %351 = vmatpush.msra.mxu0 %v47
  %352 = vmatpush.msra.mxu0 %v46
  %353 = vmatpush.msra.mxu0 %v45
  %354 = vmatpush.msra.mxu0 %v44
  %355 = vmatpush.msra.mxu0 %v43
  %356 = vmatpush.msra.mxu0 %v42
  %357 = vmatpush.msra.mxu0 %v41
  %358 = vmatpush.msra.mxu0 %v40
  %359 = vmatpush.msra.mxu0 %v39
  %360 = vmatmul.f32.gmra.mxu0 %v286
  %v361 = vpop.f32.mrf.mxu0
  %v362 = vadd.f32 %v324, %v361
  %363 = vmatmul.f32.gmra.mxu0 %v289
  %v364 = vpop.f32.mrf.mxu0
  %v365 = vadd.f32 %v327, %v364
  %366 = vmatmul.f32.gmra.mxu0 %v292
  %v367 = vpop.f32.mrf.mxu0
  %v368 = vadd.f32 %v330, %v367
  %369 = vmatmul.f32.gmra.mxu0 %v295
  %v370 = vpop.f32.mrf.mxu0
  %v371 = vadd.f32 %v333, %v370
  %372 = vmatmul.f32.gmra.mxu0 %v298
  %v373 = vpop.f32.mrf.mxu0
  %v374 = vadd.f32 %v336, %v373
  %375 = vmatmul.f32.gmra.mxu0 %v301
  %v376 = vpop.f32.mrf.mxu0
  %v377 = vadd.f32 %v339, %v376
  %378 = vmatmul.f32.gmra.mxu0 %v304
  %v379 = vpop.f32.mrf.mxu0
  %v380 = vadd.f32 %v342, %v379
  %381 = vdwg.mxu0
  %v382 = vld [vmem:[%s3] sm:$0xff]
  %v383 = vld [vmem:[%s3 + $0x8] sm:$0xff]
  %v384 = vld [vmem:[%s3 + $0x10] sm:$0xff]
  %v385 = vld [vmem:[%s3 + $0x18] sm:$0xff]
  %v386 = vld [vmem:[%s3 + $0x20] sm:$0xff]
  %v387 = vld [vmem:[%s3 + $0x28] sm:$0xff]
  %v388 = vld [vmem:[%s3 + $0x30] sm:$0xff]
  %v389 = vld [vmem:[%s3 + $0x38] sm:$0xff]
  %v390 = vld [vmem:[%s3 + $0x40] sm:$0xff]
  %v391 = vld [vmem:[%s3 + $0x48] sm:$0xff]
  %v392 = vld [vmem:[%s3 + $0x50] sm:$0xff]
  %v393 = vld [vmem:[%s3 + $0x58] sm:$0xff]
  %v394 = vld [vmem:[%s3 + $0x60] sm:$0xff]
  %v395 = vld [vmem:[%s3 + $0x68] sm:$0xff]
  %v397 = vsel %vm62, %v383, 0
  %v400 = vsel %vm62, %v385, 0
  %v403 = vsel %vm62, %v387, 0
  %v406 = vsel %vm62, %v389, 0
  %v409 = vsel %vm62, %v391, 0
  %v412 = vsel %vm62, %v393, 0
  %v415 = vsel %vm62, %v395, 0
  %417 = vmatpush.msra.mxu0 %v38
  %418 = vmatpush.msra.mxu0 %v37
  %419 = vmatpush.msra.mxu0 %v36
  %420 = vmatpush.msra.mxu0 %v35
  %421 = vmatpush.msra.mxu0 %v34
  %422 = vmatpush.msra.mxu0 %v33
  %423 = vmatpush.msra.mxu0 %v32
  %424 = vmatpush.msra.mxu0 %v31
  %425 = vmatpush.msra.mxu0 %v30
  %426 = vmatpush.msra.mxu0 %v29
  %427 = vmatpush.msra.mxu0 %v28
  %428 = vmatpush.msra.mxu0 %v27
  %429 = vmatpush.msra.mxu0 %v26
  %430 = vmatpush.msra.mxu0 %v25
  %431 = vmatpush.msra.mxu0 %v24
  %432 = vmatpush.msra.mxu0 %v23
  %433 = vmatmul.f32.gmra.mxu0 %v382
  %v434 = vpop.f32.mrf.mxu0
  %v435 = vadd.f32 0.0, %v434
  %436 = vmatmul.f32.gmra.mxu0 %v384
  %v437 = vpop.f32.mrf.mxu0
  %v438 = vadd.f32 0.0, %v437
  %439 = vmatmul.f32.gmra.mxu0 %v386
  %v440 = vpop.f32.mrf.mxu0
  %v441 = vadd.f32 0.0, %v440
  %442 = vmatmul.f32.gmra.mxu0 %v388
  %v443 = vpop.f32.mrf.mxu0
  %v444 = vadd.f32 0.0, %v443
  %445 = vmatmul.f32.gmra.mxu0 %v390
  %v446 = vpop.f32.mrf.mxu0
  %v447 = vadd.f32 0.0, %v446
  %448 = vmatmul.f32.gmra.mxu0 %v392
  %v449 = vpop.f32.mrf.mxu0
  %v450 = vadd.f32 0.0, %v449
  %451 = vmatmul.f32.gmra.mxu0 %v394
  %v452 = vpop.f32.mrf.mxu0
  %v453 = vadd.f32 0.0, %v452
  %454 = vdwg.mxu0
  %455 = vmatpush.msra.mxu0 0.0
  %456 = vmatpush.msra.mxu0 0.0
  %457 = vmatpush.msra.mxu0 0.0
  %458 = vmatpush.msra.mxu0 0.0
  %459 = vmatpush.msra.mxu0 0.0
  %460 = vmatpush.msra.mxu0 0.0
  %461 = vmatpush.msra.mxu0 0.0
  %462 = vmatpush.msra.mxu0 %v47
  %463 = vmatpush.msra.mxu0 %v46
  %464 = vmatpush.msra.mxu0 %v45
  %465 = vmatpush.msra.mxu0 %v44
  %466 = vmatpush.msra.mxu0 %v43
  %467 = vmatpush.msra.mxu0 %v42
  %468 = vmatpush.msra.mxu0 %v41
  %469 = vmatpush.msra.mxu0 %v40
  %470 = vmatpush.msra.mxu0 %v39
  %471 = vmatmul.f32.gmra.mxu0 %v397
  %v472 = vpop.f32.mrf.mxu0
  %v473 = vadd.f32 %v435, %v472
  %474 = vmatmul.f32.gmra.mxu0 %v400
  %v475 = vpop.f32.mrf.mxu0
  %v476 = vadd.f32 %v438, %v475
  %477 = vmatmul.f32.gmra.mxu0 %v403
  %v478 = vpop.f32.mrf.mxu0
  %v479 = vadd.f32 %v441, %v478
  %480 = vmatmul.f32.gmra.mxu0 %v406
  %v481 = vpop.f32.mrf.mxu0
  %v482 = vadd.f32 %v444, %v481
  %483 = vmatmul.f32.gmra.mxu0 %v409
  %v484 = vpop.f32.mrf.mxu0
  %v485 = vadd.f32 %v447, %v484
  %486 = vmatmul.f32.gmra.mxu0 %v412
  %v487 = vpop.f32.mrf.mxu0
  %v488 = vadd.f32 %v450, %v487
  %489 = vmatmul.f32.gmra.mxu0 %v415
  %v490 = vpop.f32.mrf.mxu0
  %v491 = vadd.f32 %v453, %v490
  %492 = vdwg.mxu0
  %v493 = vmax.f32 %v140, %v251
  %v494 = vmax.f32 %v143, %v254
  %v495 = vmax.f32 %v146, %v257
  %v496 = vmax.f32 %v149, %v260
  %v497 = vmax.f32 %v152, %v263
  %v498 = vmax.f32 %v155, %v266
  %v499 = vmax.f32 %v158, %v269
  %v500 = vmax.f32 %v362, %v473
  %v501 = vmax.f32 %v365, %v476
  %v502 = vmax.f32 %v368, %v479
  %v503 = vmax.f32 %v371, %v482
  %v504 = vmax.f32 %v374, %v485
  %v505 = vmax.f32 %v377, %v488
  %v506 = vmax.f32 %v380, %v491
  %v507 = vmax.f32 %v493, %v500
  %v508 = vmax.f32 %v494, %v501
  %v509 = vmax.f32 %v495, %v502
  %v510 = vmax.f32 %v496, %v503
  %v511 = vmax.f32 %v497, %v504
  %v512 = vmax.f32 %v498, %v505
  %v513 = vmax.f32 %v499, %v506
  %v514 = vld [vmem:[%s5] sm:$0x1]
  %v516 = vperm.slane %v514, 0
  %v518 = vadd.f32 %v507, %v516
  %v519 = vadd.f32 %v508, %v516
  %v520 = vadd.f32 %v509, %v516
  %v521 = vadd.f32 %v510, %v516
  %v522 = vadd.f32 %v511, %v516
  %v523 = vadd.f32 %v512, %v516
  %v524 = vadd.f32 %v513, %v516
  %v525 = vmax.f32 %v518, 0.0
  %v526 = vmax.f32 %v519, 0.0
  %v527 = vmax.f32 %v520, 0.0
  %v528 = vmax.f32 %v521, 0.0
  %v529 = vmax.f32 %v522, 0.0
  %v530 = vmax.f32 %v523, 0.0
  %v531 = vmax.f32 %v524, 0.0
  %532 = vst [vmem:[%s6] sm:$0xff] %v525
  %533 = vst [vmem:[%s6 + $0x8] sm:$0xff] %v526
  %534 = vst [vmem:[%s6 + $0x10] sm:$0xff] %v527
  %535 = vst [vmem:[%s6 + $0x18] sm:$0xff] %v528
  %536 = vst [vmem:[%s6 + $0x20] sm:$0xff] %v529
  %537 = vst [vmem:[%s6 + $0x28] sm:$0xff] %v530
  %538 = vst [vmem:[%s6 + $0x30] sm:$0xff] %v531
  // Predicated region
  $region26: #{simple_net_final_forward.4} parent=0 // pred_check
    _
  $region27: #{simple_net_final_forward.4} parent=0 // pred_check_branch
    %540 = sbr.rel (0) target = $region29
  $region28: #{simple_net_final_forward.4} parent=0 // pred_region
    _
  $region29: #{simple_net_final_forward.4} parent=0 // pred_fallthru
    _
  // Predicated region
  $region30: #{simple_net_final_forward.4} parent=0 // pred_check
    _
  $region31: #{simple_net_final_forward.4} parent=0 // pred_check_branch
    %542 = sbr.rel (0) target = $region33
  $region32: #{simple_net_final_forward.4} parent=0 // pred_region
    _
  $region33: #{simple_net_final_forward.4} parent=0 // pred_fallthru
    _

// kernel: simple_net_final_forward.5
$region0: #{simple_net_final_forward.5}
  #allocation0 [shape = 'u32[]', space=smem, size = 0x4, offset = 0x4, fixed_abs, tag = 'smem constant byte address 0x4 - core index']
  #allocation1 [shape = 'u32[72,128]{1,0:T(1,128)}', space=vmem, size = 0x9000, scoped, tag = 'internal scratch']
  %s0 = inlined_call_operand.vmem [shape: f32[8,400], index: 0, kind: input, shape index: {}]
  %s1 = inlined_call_operand.vmem [shape: f32[400,128], index: 1, kind: input, shape index: {}]
  %s2 = inlined_call_operand.vmem [shape: f32[1,128], index: 2, kind: input, shape index: {}]
  %s3 = inlined_call_operand.vmem [shape: f32[128,128], index: 3, kind: input, shape index: {}]
  %s4 = inlined_call_operand.vmem [shape: f32[1,128], index: 4, kind: input, shape index: {}]
  %s5 = inlined_call_operand.vmem [shape: f32[8,128], index: 5, kind: output, shape index: {}]
  %s6 = sld [smem:[#allocation0]]
  $region30: #{simple_net_final_forward.5} parent=0
    _
  %s8 = ssub.s32 1, %s6
  %s9 = scalar_select 0, %s8, %s6
  // Predicated region
  $region2: #{simple_net_final_forward.5} parent=0 // pred_check
    _
  $region3: #{simple_net_final_forward.5} parent=0 // pred_check_branch
    %11 = sbr.rel (0) target = $region5
  $region4: #{simple_net_final_forward.5} parent=0 // pred_region
    _
  $region5: #{simple_net_final_forward.5} parent=0 // pred_fallthru
    _
  // Predicated region
  $region6: #{simple_net_final_forward.5} parent=0 // pred_check
    _
  $region7: #{simple_net_final_forward.5} parent=0 // pred_check_branch
    %13 = sbr.rel (0) target = $region9
  $region8: #{simple_net_final_forward.5} parent=0 // pred_region
    _
  $region9: #{simple_net_final_forward.5} parent=0 // pred_fallthru
    _
  // Predicated region
  $region10: #{simple_net_final_forward.5} parent=0 // pred_check
    _
  $region11: #{simple_net_final_forward.5} parent=0 // pred_check_branch
    %15 = sbr.rel (0) target = $region13
  $region12: #{simple_net_final_forward.5} parent=0 // pred_region
    _
  $region13: #{simple_net_final_forward.5} parent=0 // pred_fallthru
    _
  // Predicated region
  $region14: #{simple_net_final_forward.5} parent=0 // pred_check
    _
  $region15: #{simple_net_final_forward.5} parent=0 // pred_check_branch
    %17 = sbr.rel (0) target = $region17
  $region16: #{simple_net_final_forward.5} parent=0 // pred_region
    _
  $region17: #{simple_net_final_forward.5} parent=0 // pred_fallthru
    _
  // Predicated region
  $region18: #{simple_net_final_forward.5} parent=0 // pred_check
    _
  $region19: #{simple_net_final_forward.5} parent=0 // pred_check_branch
    %19 = sbr.rel (0) target = $region21
  $region20: #{simple_net_final_forward.5} parent=0 // pred_region
    _
  $region21: #{simple_net_final_forward.5} parent=0 // pred_fallthru
    _
  %v20 = vld [vmem:[%s0] sm:$0xff]
  %v21 = vld [vmem:[%s0 + $0x8] sm:$0xff]
  %v22 = vld [vmem:[%s0 + $0x10] sm:$0xff]
  %v23 = vld [vmem:[%s0 + $0x18] sm:$0xff]
  %v24 = vld [vmem:[%s1] sm:$0xff]
  %v25 = vld [vmem:[%s1 + $0x8] sm:$0xff]
  %v26 = vld [vmem:[%s1 + $0x10] sm:$0xff]
  %v27 = vld [vmem:[%s1 + $0x18] sm:$0xff]
  %v28 = vld [vmem:[%s1 + $0x20] sm:$0xff]
  %v29 = vld [vmem:[%s1 + $0x28] sm:$0xff]
  %v30 = vld [vmem:[%s1 + $0x30] sm:$0xff]
  %v31 = vld [vmem:[%s1 + $0x38] sm:$0xff]
  %v32 = vld [vmem:[%s1 + $0x40] sm:$0xff]
  %v33 = vld [vmem:[%s1 + $0x48] sm:$0xff]
  %v34 = vld [vmem:[%s1 + $0x50] sm:$0xff]
  %v35 = vld [vmem:[%s1 + $0x58] sm:$0xff]
  %v36 = vld [vmem:[%s1 + $0x60] sm:$0xff]
  %v37 = vld [vmem:[%s1 + $0x68] sm:$0xff]
  %v38 = vld [vmem:[%s1 + $0x70] sm:$0xff]
  %v39 = vld [vmem:[%s1 + $0x78] sm:$0xff]
  %v40 = vld [vmem:[%s1 + $0x80] sm:$0xff]
  %v41 = vld [vmem:[%s1 + $0x88] sm:$0xff]
  %v42 = vld [vmem:[%s1 + $0x90] sm:$0xff]
  %v43 = vld [vmem:[%s1 + $0x98] sm:$0xff]
  %v44 = vld [vmem:[%s1 + $0xa0] sm:$0xff]
  %v45 = vld [vmem:[%s1 + $0xa8] sm:$0xff]
  %v46 = vld [vmem:[%s1 + $0xb0] sm:$0xff]
  %v47 = vld [vmem:[%s1 + $0xb8] sm:$0xff]
  %v48 = vld [vmem:[%s1 + $0xc0] sm:$0xff]
  %v49 = vld [vmem:[%s1 + $0xc8] sm:$0xff]
  %v50 = vld [vmem:[%s1 + $0xd0] sm:$0xff]
  %v51 = vld [vmem:[%s1 + $0xd8] sm:$0xff]
  %v52 = vld [vmem:[%s1 + $0xe0] sm:$0xff]
  %v53 = vld [vmem:[%s1 + $0xe8] sm:$0xff]
  %v54 = vld [vmem:[%s1 + $0xf0] sm:$0xff]
  %v55 = vld [vmem:[%s1 + $0xf8] sm:$0xff]
  %v56 = vld [vmem:[%s1 + $0x100] sm:$0xff]
  %v57 = vld [vmem:[%s1 + $0x108] sm:$0xff]
  %v58 = vld [vmem:[%s1 + $0x110] sm:$0xff]
  %v59 = vld [vmem:[%s1 + $0x118] sm:$0xff]
  %v60 = vld [vmem:[%s1 + $0x120] sm:$0xff]
  %v61 = vld [vmem:[%s1 + $0x128] sm:$0xff]
  %v62 = vld [vmem:[%s1 + $0x130] sm:$0xff]
  %v63 = vld [vmem:[%s1 + $0x138] sm:$0xff]
  %v64 = vld [vmem:[%s1 + $0x140] sm:$0xff]
  %v65 = vld [vmem:[%s1 + $0x148] sm:$0xff]
  %v66 = vld [vmem:[%s1 + $0x150] sm:$0xff]
  %v67 = vld [vmem:[%s1 + $0x158] sm:$0xff]
  %v68 = vld [vmem:[%s1 + $0x160] sm:$0xff]
  %v69 = vld [vmem:[%s1 + $0x168] sm:$0xff]
  %v70 = vld [vmem:[%s1 + $0x170] sm:$0xff]
  %v71 = vld [vmem:[%s1 + $0x178] sm:$0xff]
  %v72 = vld [vmem:[%s1 + $0x180] sm:$0xff]
  %v73 = vld [vmem:[%s1 + $0x188] sm:$0xff]
  %v74 = vld [vmem:[%s2] sm:$0x1]
  %v76 = vperm.slane %v74, 0
  %vm78 = vcmask 130048
  %v80 = vsel %vm78, %v23, 0
  %82 = vmatpush.msra.mxu0 %v39
  %83 = vmatpush.msra.mxu0 %v38
  %84 = vmatpush.msra.mxu0 %v37
  %85 = vmatpush.msra.mxu0 %v36
  %86 = vmatpush.msra.mxu0 %v35
  %87 = vmatpush.msra.mxu0 %v34
  %88 = vmatpush.msra.mxu0 %v33
  %89 = vmatpush.msra.mxu0 %v32
  %90 = vmatpush.msra.mxu0 %v31
  %91 = vmatpush.msra.mxu0 %v30
  %92 = vmatpush.msra.mxu0 %v29
  %93 = vmatpush.msra.mxu0 %v28
  %94 = vmatpush.msra.mxu0 %v27
  %95 = vmatpush.msra.mxu0 %v26
  %96 = vmatpush.msra.mxu0 %v25
  %97 = vmatpush.msra.mxu0 %v24
  %98 = vmatmul.f32.gmra.mxu0 %v20
  %v99 = vpop.f32.mrf.mxu0
  %v100 = vadd.f32 %v76, %v99
  %101 = vdwg.mxu0
  %102 = vmatpush.msra.mxu0 %v55
  %103 = vmatpush.msra.mxu0 %v54
  %104 = vmatpush.msra.mxu0 %v53
  %105 = vmatpush.msra.mxu0 %v52
  %106 = vmatpush.msra.mxu0 %v51
  %107 = vmatpush.msra.mxu0 %v50
  %108 = vmatpush.msra.mxu0 %v49
  %109 = vmatpush.msra.mxu0 %v48
  %110 = vmatpush.msra.mxu0 %v47
  %111 = vmatpush.msra.mxu0 %v46
  %112 = vmatpush.msra.mxu0 %v45
  %113 = vmatpush.msra.mxu0 %v44
  %114 = vmatpush.msra.mxu0 %v43
  %115 = vmatpush.msra.mxu0 %v42
  %116 = vmatpush.msra.mxu0 %v41
  %117 = vmatpush.msra.mxu0 %v40
  %118 = vmatmul.f32.gmra.mxu0 %v21
  %v119 = vpop.f32.mrf.mxu0
  %v120 = vadd.f32 %v100, %v119
  %121 = vdwg.mxu0
  %122 = vmatpush.msra.mxu0 %v71
  %123 = vmatpush.msra.mxu0 %v70
  %124 = vmatpush.msra.mxu0 %v69
  %125 = vmatpush.msra.mxu0 %v68
  %126 = vmatpush.msra.mxu0 %v67
  %127 = vmatpush.msra.mxu0 %v66
  %128 = vmatpush.msra.mxu0 %v65
  %129 = vmatpush.msra.mxu0 %v64
  %130 = vmatpush.msra.mxu0 %v63
  %131 = vmatpush.msra.mxu0 %v62
  %132 = vmatpush.msra.mxu0 %v61
  %133 = vmatpush.msra.mxu0 %v60
  %134 = vmatpush.msra.mxu0 %v59
  %135 = vmatpush.msra.mxu0 %v58
  %136 = vmatpush.msra.mxu0 %v57
  %137 = vmatpush.msra.mxu0 %v56
  %138 = vmatmul.f32.gmra.mxu0 %v22
  %v139 = vpop.f32.mrf.mxu0
  %v140 = vadd.f32 %v120, %v139
  %141 = vdwg.mxu0
  %142 = vmatpush.msra.mxu0 0.0
  %143 = vmatpush.msra.mxu0 0.0
  %144 = vmatpush.msra.mxu0 0.0
  %145 = vmatpush.msra.mxu0 0.0
  %146 = vmatpush.msra.mxu0 0.0
  %147 = vmatpush.msra.mxu0 0.0
  %148 = vmatpush.msra.mxu0 0.0
  %149 = vmatpush.msra.mxu0 0.0
  %150 = vmatpush.msra.mxu0 0.0
  %151 = vmatpush.msra.mxu0 0.0
  %152 = vmatpush.msra.mxu0 0.0
  %153 = vmatpush.msra.mxu0 0.0
  %154 = vmatpush.msra.mxu0 0.0
  %155 = vmatpush.msra.mxu0 0.0
  %156 = vmatpush.msra.mxu0 %v73
  %157 = vmatpush.msra.mxu0 %v72
  %158 = vmatmul.f32.gmra.mxu0 %v80
  %v159 = vpop.f32.mrf.mxu0
  %v160 = vadd.f32 %v140, %v159
  %161 = vdwg.mxu0
  %v162 = vmax.f32 %v160, 0.0
  %v163 = vld [vmem:[%s3] sm:$0xff]
  %v164 = vld [vmem:[%s3 + $0x8] sm:$0xff]
  %v165 = vld [vmem:[%s3 + $0x10] sm:$0xff]
  %v166 = vld [vmem:[%s3 + $0x18] sm:$0xff]
  %v167 = vld [vmem:[%s3 + $0x20] sm:$0xff]
  %v168 = vld [vmem:[%s3 + $0x28] sm:$0xff]
  %v169 = vld [vmem:[%s3 + $0x30] sm:$0xff]
  %v170 = vld [vmem:[%s3 + $0x38] sm:$0xff]
  %v171 = vld [vmem:[%s3 + $0x40] sm:$0xff]
  %v172 = vld [vmem:[%s3 + $0x48] sm:$0xff]
  %v173 = vld [vmem:[%s3 + $0x50] sm:$0xff]
  %v174 = vld [vmem:[%s3 + $0x58] sm:$0xff]
  %v175 = vld [vmem:[%s3 + $0x60] sm:$0xff]
  %v176 = vld [vmem:[%s3 + $0x68] sm:$0xff]
  %v177 = vld [vmem:[%s3 + $0x70] sm:$0xff]
  %v178 = vld [vmem:[%s3 + $0x78] sm:$0xff]
  %v179 = vld [vmem:[%s4] sm:$0x1]
  %v181 = vperm.slane %v179, 0
  %183 = vmatpush.msra.mxu0 %v178
  %184 = vmatpush.msra.mxu0 %v177
  %185 = vmatpush.msra.mxu0 %v176
  %186 = vmatpush.msra.mxu0 %v175
  %187 = vmatpush.msra.mxu0 %v174
  %188 = vmatpush.msra.mxu0 %v173
  %189 = vmatpush.msra.mxu0 %v172
  %190 = vmatpush.msra.mxu0 %v171
  %191 = vmatpush.msra.mxu0 %v170
  %192 = vmatpush.msra.mxu0 %v169
  %193 = vmatpush.msra.mxu0 %v168
  %194 = vmatpush.msra.mxu0 %v167
  %195 = vmatpush.msra.mxu0 %v166
  %196 = vmatpush.msra.mxu0 %v165
  %197 = vmatpush.msra.mxu0 %v164
  %198 = vmatpush.msra.mxu0 %v163
  %199 = vmatmul.f32.gmra.mxu0 %v162
  %v200 = vpop.f32.mrf.mxu0
  %v201 = vadd.f32 %v181, %v200
  %202 = vdwg.mxu0
  %203 = vst [vmem:[%s5] sm:$0xff] %v201
  // Predicated region
  $region22: #{simple_net_final_forward.5} parent=0 // pred_check
    _
  $region23: #{simple_net_final_forward.5} parent=0 // pred_check_branch
    %205 = sbr.rel (0) target = $region25
  $region24: #{simple_net_final_forward.5} parent=0 // pred_region
    _
  $region25: #{simple_net_final_forward.5} parent=0 // pred_fallthru
    _
  // Predicated region
  $region26: #{simple_net_final_forward.5} parent=0 // pred_check
    _
  $region27: #{simple_net_final_forward.5} parent=0 // pred_check_branch
    %207 = sbr.rel (0) target = $region29
  $region28: #{simple_net_final_forward.5} parent=0 // pred_region
    _
  $region29: #{simple_net_final_forward.5} parent=0 // pred_fallthru
    _

</llo_original>
